<compile_context>
chip_gen: v7x
topology: tpu7x:2x2x1
jax: 0.10.0
libtpu: 0.0.40
codegen_flags: <defaults>
</compile_context>

<pallas_src>
import jax
import jax.numpy as jnp
from jax.experimental import pallas as pl
from jax.experimental.pallas import tpu as pltpu

INPUT_DIM = 26
HIDDEN_DIMS = [128, 128, 64]
OUTPUT_DIM = 4

IN_PAD = 32        # 26 -> 32: sublane-aligned K for the first matmul
OUT_PAD = 128      # 4 -> 128: lane-dense output block / full-width last matmul
NEG_FILL = -1e30   # large negative (not -inf) so max-subtract never produces NaN


def mlp_kernel(x_ref, w1_ref, b1_ref, w2_ref, b2_ref, w3_ref, b3_ref,
               wo_ref, bo_ref, o_ref):
    # Elementwise (bias-add / ReLU) dtype follows the hidden-bias dtype:
    # f32 on v5e (no bf16 VALU), bf16 on v6e/v7x (halves vreg footprint).
    ew = b1_ref.dtype

    # hidden layer 1: (tile_b, 32) bf16 @ (32, 128) bf16 -> f32 MXU acc
    h = jnp.dot(x_ref[...], w1_ref[...], preferred_element_type=jnp.float32)
    h = jnp.maximum(h.astype(ew) + b1_ref[...], 0.0).astype(jnp.bfloat16)
    # hidden layer 2
    h = jnp.dot(h, w2_ref[...], preferred_element_type=jnp.float32)
    h = jnp.maximum(h.astype(ew) + b2_ref[...], 0.0).astype(jnp.bfloat16)
    # hidden layer 3
    h = jnp.dot(h, w3_ref[...], preferred_element_type=jnp.float32)
    h = jnp.maximum(h.astype(ew) + b3_ref[...], 0.0).astype(jnp.bfloat16)
    # output layer, lane-dense N=128 (padded lanes carry bias = -1e30 -> exp -> 0)
    logits = jnp.dot(h, wo_ref[...], preferred_element_type=jnp.float32)
    logits = logits + bo_ref[...]
    # numerically-stable softmax over the (padded) feature axis, kept in f32
    m = jnp.max(logits, axis=-1, keepdims=True)
    e = jnp.exp(logits - m)
    denom = jnp.sum(e, axis=-1, keepdims=True)
    # bf16 store halves the output HBM writeback.
    # TODO(synk): if the out-stream DMA is still exposed on v5e, pack 32 rows' 4 probs
    # into one 128-lane row in-kernel (32x less writeback) at the cost of one XLU relayout.
    o_ref[...] = (e * pl.reciprocal(denom, approx=True)).astype(o_ref.dtype)


def _use_bf16_elementwise():
    """bf16 VALU exists on v6e/v7x; keep the elementwise path f32 on v5e."""
    try:
        kind = jax.devices()[0].device_kind.lower()
    except Exception:
        return False
    return "v5" not in kind


def prepare_params(params, *, bf16_elementwise=None):
    """One-time padding / casting of weights so the forward consumes them directly."""
    if bf16_elementwise is None:
        bf16_elementwise = _use_bf16_elementwise()
    ew = jnp.bfloat16 if bf16_elementwise else jnp.float32

    w1 = jnp.pad(params["w1"], ((0, IN_PAD - INPUT_DIM), (0, 0))).astype(jnp.bfloat16)
    w2 = params["w2"].astype(jnp.bfloat16)
    w3 = params["w3"].astype(jnp.bfloat16)
    wo = jnp.pad(params["wo"], ((0, 0), (0, OUT_PAD - OUTPUT_DIM))).astype(jnp.bfloat16)
    # Hidden biases carry the elementwise dtype; output bias stays f32 (softmax path)
    # with padded lanes filled by -1e30 so exp underflows to exact 0.
    b1 = params["b1"].astype(ew)
    b2 = params["b2"].astype(ew)
    b3 = params["b3"].astype(ew)
    bo = jnp.pad(params["bo"], ((0, 0), (0, OUT_PAD - OUTPUT_DIM)),
                 constant_values=NEG_FILL).astype(jnp.float32)
    return {"w1": w1, "b1": b1, "w2": w2, "b2": b2,
            "w3": w3, "b3": b3, "wo": wo, "bo": bo}


def linear_nn_forward(x, prepared, *, tile_b=1024):
    """Fused MLP forward (3 hidden layers + output + softmax) in one Pallas kernel.

    x: (B, 26) f32. prepared: output of prepare_params(). Works for arbitrary B
    (padded to a multiple of tile_b; tile clamped for small batches).
    """
    B = x.shape[0]
    # Clamp tile to round_up(B, 256) so tiny batches are not padded to a full 1024-row
    # tile; big batches use 1024-row tiles and naturally give >=2 parallel tiles
    # (megacore-shardable on v7x).
    tile_b = max(256, min(tile_b, ((B + 255) // 256) * 256))
    n_tiles = pl.cdiv(B, tile_b)
    B_pad = n_tiles * tile_b

    # Only the activations are padded / cast per call.
    x_p = jnp.pad(x, ((0, B_pad - B), (0, IN_PAD - INPUT_DIM))).astype(jnp.bfloat16)

    w1, b1 = prepared["w1"], prepared["b1"]
    w2, b2 = prepared["w2"], prepared["b2"]
    w3, b3 = prepared["w3"], prepared["b3"]
    wo, bo = prepared["wo"], prepared["bo"]

    def full_spec(arr):
        # whole (grid-invariant) weight/bias array per grid step
        return pl.BlockSpec(arr.shape, lambda i: (0, 0))

    in_specs = [
        pl.BlockSpec((tile_b, IN_PAD), lambda i: (i, 0)),
        full_spec(w1), full_spec(b1),
        full_spec(w2), full_spec(b2),
        full_spec(w3), full_spec(b3),
        full_spec(wo), full_spec(bo),
    ]
    out_specs = pl.BlockSpec((tile_b, OUT_PAD), lambda i: (i, 0))

    # Advisory cost estimate so XLA doesn't schedule the call as zero-cost.
    flops = 2 * B_pad * (IN_PAD * 128 + 128 * 128 + 128 * 64 + 64 * OUT_PAD)
    transcendentals = B_pad * OUT_PAD
    bytes_accessed = (
        x_p.size * 2 + B_pad * OUT_PAD * 2                       # bf16 in/out streams
        + (w1.size + w2.size + w3.size + wo.size) * 2
        + (b1.size + b2.size + b3.size) * b1.dtype.itemsize + bo.size * 4)

    out = pl.pallas_call(
        mlp_kernel,
        out_shape=jax.ShapeDtypeStruct((B_pad, OUT_PAD), jnp.bfloat16),
        grid_spec=pltpu.PrefetchScalarGridSpec(
            num_scalar_prefetch=0,
            grid=(n_tiles,),
            in_specs=in_specs,
            out_specs=out_specs,
        ),
        compiler_params=pltpu.CompilerParams(
            dimension_semantics=("parallel",)),
        cost_estimate=pl.CostEstimate(
            flops=flops,
            transcendentals=transcendentals,
            bytes_accessed=bytes_accessed),
    )(x_p, w1, b1, w2, b2, w3, b3, wo, bo)

    return out[:B, :OUTPUT_DIM].astype(jnp.float32)


def xavier_uniform(key, fan_in, fan_out):
    # matches torch.nn.init.xavier_uniform_ (gain=1.0)
    limit = jnp.sqrt(6.0 / (fan_in + fan_out))
    # stored directly as [in, out] (transposed relative to torch's [out, in])
    return jax.random.uniform(key, (fan_in, fan_out), jnp.float32,
                              minval=-limit, maxval=limit)


def init_params(key):
    dims = [INPUT_DIM] + HIDDEN_DIMS + [OUTPUT_DIM]
    keys = jax.random.split(key, len(dims) - 1)
    names = ["1", "2", "3", "o"]
    params = {}
    for k, name, fin, fout in zip(keys, names, dims[:-1], dims[1:]):
        params["w" + name] = xavier_uniform(k, fin, fout)
        params["b" + name] = jnp.zeros((1, fout), jnp.float32)
    return params


def reference_forward(x, params):
    """Pure-JAX f32 reference of Linear_NN.forward (dropout = identity)."""
    h = x
    for name in ["1", "2", "3"]:
        h = jnp.maximum(h @ params["w" + name] + params["b" + name], 0.0)
    logits = h @ params["wo"] + params["bo"]
    return jax.nn.softmax(logits, axis=1)


if __name__ == "__main__":
    key = jax.random.PRNGKey(0)
    pkey, xkey = jax.random.split(key)
    params = init_params(pkey)

    # TODO(synk): dropout is treated as identity (inference/eval mode); training-mode
    # stochastic dropout would use pltpu.prng_seed / pltpu.prng_random_bits.
    prepared = prepare_params(params)
    fwd = jax.jit(linear_nn_forward)

    # Small-batch check (single 256-row tile).
    B = 8
    x = jax.random.normal(xkey, (B, INPUT_DIM), jnp.float32)
    out = jax.block_until_ready(fwd(x, prepared))
    assert out.shape == (B, OUTPUT_DIM)
    assert bool(jnp.all(jnp.isfinite(out)))
    # softmax rows sum to 1 (approx reciprocal + bf16 output -> loose tol)
    assert jnp.allclose(jnp.sum(out, axis=1), 1.0, atol=2e-2)
    ref = reference_forward(x, params)
    assert jnp.allclose(out, ref, atol=5e-2)

    # Multi-tile check: exercises the 1024-row tile path, batch padding, and
    # >=2 parallel tiles (megacore shard on v7x).
    B2 = 3000
    x2 = jax.random.normal(jax.random.PRNGKey(1), (B2, INPUT_DIM), jnp.float32)
    out2 = jax.block_until_ready(fwd(x2, prepared))
    assert out2.shape == (B2, OUTPUT_DIM)
    ref2 = reference_forward(x2, params)
    assert jnp.allclose(out2, ref2, atol=5e-2)

    print("KERNEL_OK")
</pallas_src>

<mosaic_0001>
module attributes {stable_mosaic.version = 11 : i64} {
  func.func @mlp_kernel(%arg0: i32, %arg1: memref<256x32xbf16, #tpu.memory_space<vmem>>, %arg2: memref<32x128xbf16, #tpu.memory_space<vmem>>, %arg3: memref<1x128xbf16, #tpu.memory_space<vmem>>, %arg4: memref<128x128xbf16, #tpu.memory_space<vmem>>, %arg5: memref<1x128xbf16, #tpu.memory_space<vmem>>, %arg6: memref<128x64xbf16, #tpu.memory_space<vmem>>, %arg7: memref<1x64xbf16, #tpu.memory_space<vmem>>, %arg8: memref<64x128xbf16, #tpu.memory_space<vmem>>, %arg9: memref<1x128xf32, #tpu.memory_space<vmem>>, %arg10: memref<256x128xbf16, #tpu.memory_space<vmem>>) attributes {dimension_semantics = [#tpu.dimension_semantics<parallel>], iteration_bounds = array<i64: 1>, scalar_prefetch = 0 : i64, scratch_operands = 0 : i64, tpu.core_type = #tpu.core_type<tc>, window_params = [{transform_indices = @transform_0, window_bounds = array<i64: 256, 32>}, {pipeline_mode = #tpu.pipeline_mode<synchronous>, transform_indices = @transform_1, window_bounds = array<i64: 32, 128>}, {pipeline_mode = #tpu.pipeline_mode<synchronous>, transform_indices = @transform_2, window_bounds = array<i64: 1, 128>}, {pipeline_mode = #tpu.pipeline_mode<synchronous>, transform_indices = @transform_3, window_bounds = array<i64: 128, 128>}, {pipeline_mode = #tpu.pipeline_mode<synchronous>, transform_indices = @transform_4, window_bounds = array<i64: 1, 128>}, {pipeline_mode = #tpu.pipeline_mode<synchronous>, transform_indices = @transform_5, window_bounds = array<i64: 128, 64>}, {pipeline_mode = #tpu.pipeline_mode<synchronous>, transform_indices = @transform_6, window_bounds = array<i64: 1, 64>}, {pipeline_mode = #tpu.pipeline_mode<synchronous>, transform_indices = @transform_7, window_bounds = array<i64: 64, 128>}, {pipeline_mode = #tpu.pipeline_mode<synchronous>, transform_indices = @transform_8, window_bounds = array<i64: 1, 128>}, {transform_indices = @transform_9, window_bounds = array<i64: 256, 128>}]} {
    %c0 = arith.constant 0 : index
    %c0_0 = arith.constant 0 : index
    %0 = vector.load %arg1[%c0, %c0_0] : memref<256x32xbf16, #tpu.memory_space<vmem>>, vector<256x32xbf16>
    %c0_1 = arith.constant 0 : index
    %c0_2 = arith.constant 0 : index
    %1 = vector.load %arg2[%c0_1, %c0_2] : memref<32x128xbf16, #tpu.memory_space<vmem>>, vector<32x128xbf16>
    %cst = arith.constant dense<0.000000e+00> : vector<256x128xf32>
    %2 = tpu.matmul %0, %1, %cst {dimension_numbers = #tpu.dot_dimension_numbers<[1], [0], [0], [1], [0, 0, 1, 1], [], []>} : vector<256x32xbf16>, vector<32x128xbf16>, vector<256x128xf32> -> vector<256x128xf32>
    %3 = arith.truncf %2 : vector<256x128xf32> to vector<256x128xbf16>
    %c0_3 = arith.constant 0 : index
    %c0_4 = arith.constant 0 : index
    %4 = vector.load %arg3[%c0_3, %c0_4] : memref<1x128xbf16, #tpu.memory_space<vmem>>, vector<1x128xbf16>
    %5 = vector.broadcast %4 : vector<1x128xbf16> to vector<256x128xbf16>
    %6 = arith.addf %3, %5 : vector<256x128xbf16>
    %cst_5 = arith.constant 0.000000e+00 : bf16
    %7 = vector.broadcast %cst_5 : bf16 to vector<256x128xbf16>
    %8 = arith.maximumf %6, %7 : vector<256x128xbf16>
    %c0_6 = arith.constant 0 : index
    %c0_7 = arith.constant 0 : index
    %9 = vector.load %arg4[%c0_6, %c0_7] : memref<128x128xbf16, #tpu.memory_space<vmem>>, vector<128x128xbf16>
    %cst_8 = arith.constant dense<0.000000e+00> : vector<256x128xf32>
    %10 = tpu.matmul %8, %9, %cst_8 {dimension_numbers = #tpu.dot_dimension_numbers<[1], [0], [0], [1], [0, 0, 1, 1], [], []>} : vector<256x128xbf16>, vector<128x128xbf16>, vector<256x128xf32> -> vector<256x128xf32>
    %11 = arith.truncf %10 : vector<256x128xf32> to vector<256x128xbf16>
    %c0_9 = arith.constant 0 : index
    %c0_10 = arith.constant 0 : index
    %12 = vector.load %arg5[%c0_9, %c0_10] : memref<1x128xbf16, #tpu.memory_space<vmem>>, vector<1x128xbf16>
    %13 = vector.broadcast %12 : vector<1x128xbf16> to vector<256x128xbf16>
    %14 = arith.addf %11, %13 : vector<256x128xbf16>
    %cst_11 = arith.constant 0.000000e+00 : bf16
    %15 = vector.broadcast %cst_11 : bf16 to vector<256x128xbf16>
    %16 = arith.maximumf %14, %15 : vector<256x128xbf16>
    %c0_12 = arith.constant 0 : index
    %c0_13 = arith.constant 0 : index
    %17 = vector.load %arg6[%c0_12, %c0_13] : memref<128x64xbf16, #tpu.memory_space<vmem>>, vector<128x64xbf16>
    %cst_14 = arith.constant dense<0.000000e+00> : vector<256x64xf32>
    %18 = tpu.matmul %16, %17, %cst_14 {dimension_numbers = #tpu.dot_dimension_numbers<[1], [0], [0], [1], [0, 0, 1, 1], [], []>} : vector<256x128xbf16>, vector<128x64xbf16>, vector<256x64xf32> -> vector<256x64xf32>
    %19 = arith.truncf %18 : vector<256x64xf32> to vector<256x64xbf16>
    %c0_15 = arith.constant 0 : index
    %c0_16 = arith.constant 0 : index
    %20 = vector.load %arg7[%c0_15, %c0_16] : memref<1x64xbf16, #tpu.memory_space<vmem>>, vector<1x64xbf16>
    %21 = vector.broadcast %20 : vector<1x64xbf16> to vector<256x64xbf16>
    %22 = arith.addf %19, %21 : vector<256x64xbf16>
    %cst_17 = arith.constant 0.000000e+00 : bf16
    %23 = vector.broadcast %cst_17 : bf16 to vector<256x64xbf16>
    %24 = arith.maximumf %22, %23 : vector<256x64xbf16>
    %c0_18 = arith.constant 0 : index
    %c0_19 = arith.constant 0 : index
    %25 = vector.load %arg8[%c0_18, %c0_19] : memref<64x128xbf16, #tpu.memory_space<vmem>>, vector<64x128xbf16>
    %cst_20 = arith.constant dense<0.000000e+00> : vector<256x128xf32>
    %26 = tpu.matmul %24, %25, %cst_20 {dimension_numbers = #tpu.dot_dimension_numbers<[1], [0], [0], [1], [0, 0, 1, 1], [], []>} : vector<256x64xbf16>, vector<64x128xbf16>, vector<256x128xf32> -> vector<256x128xf32>
    %c0_21 = arith.constant 0 : index
    %c0_22 = arith.constant 0 : index
    %27 = vector.load %arg9[%c0_21, %c0_22] : memref<1x128xf32, #tpu.memory_space<vmem>>, vector<1x128xf32>
    %28 = vector.broadcast %27 : vector<1x128xf32> to vector<256x128xf32>
    %29 = arith.addf %26, %28 : vector<256x128xf32>
    %cst_23 = arith.constant dense<0xFF800000> : vector<256xf32>
    %30 = vector.multi_reduction <maximumf>, %29, %cst_23 [1] : vector<256x128xf32> to vector<256xf32>
    %31 = vector.shape_cast %30 : vector<256xf32> to vector<256x1xf32>
    %32 = vector.broadcast %31 : vector<256x1xf32> to vector<256x128xf32>
    %33 = arith.subf %29, %32 : vector<256x128xf32>
    %34 = math.exp %33 : vector<256x128xf32>
    %cst_24 = arith.constant dense<0.000000e+00> : vector<256xf32>
    %35 = vector.multi_reduction <add>, %34, %cst_24 [1] : vector<256x128xf32> to vector<256xf32>
    %36 = vector.shape_cast %35 : vector<256xf32> to vector<256x1xf32>
    %37 = tpu.reciprocal %36 {approx = true} : vector<256x1xf32> -> vector<256x1xf32>
    %38 = vector.broadcast %37 : vector<256x1xf32> to vector<256x128xf32>
    %39 = arith.mulf %34, %38 : vector<256x128xf32>
    %40 = arith.truncf %39 : vector<256x128xf32> to vector<256x128xbf16>
    %c0_25 = arith.constant 0 : index
    %c0_26 = arith.constant 0 : index
    %41 = vector.load %arg10[%c0_25, %c0_26] : memref<256x128xbf16, #tpu.memory_space<vmem>>, vector<256x128xbf16>
    tpu.vector_store %arg10[%c0_25, %c0_26], %40 {strides = array<i32>} : memref<256x128xbf16, #tpu.memory_space<vmem>>, vector<256x128xbf16>,
    return
  }
  func.func @transform_0(%arg0: i32) -> (i32, i32) {
    %c0_i32 = arith.constant 0 : i32
    %c0_i32_0 = arith.constant 0 : i32
    return %arg0, %c0_i32 : i32, i32
  }
  func.func @transform_1(%arg0: i32) -> (i32, i32) {
    %c0_i32 = arith.constant 0 : i32
    %c0_i32_0 = arith.constant 0 : i32
    %c0_i32_1 = arith.constant 0 : i32
    return %c0_i32, %c0_i32_0 : i32, i32
  }
  func.func @transform_2(%arg0: i32) -> (i32, i32) {
    %c0_i32 = arith.constant 0 : i32
    %c0_i32_0 = arith.constant 0 : i32
    %c0_i32_1 = arith.constant 0 : i32
    return %c0_i32, %c0_i32_0 : i32, i32
  }
  func.func @transform_3(%arg0: i32) -> (i32, i32) {
    %c0_i32 = arith.constant 0 : i32
    %c0_i32_0 = arith.constant 0 : i32
    %c0_i32_1 = arith.constant 0 : i32
    return %c0_i32, %c0_i32_0 : i32, i32
  }
  func.func @transform_4(%arg0: i32) -> (i32, i32) {
    %c0_i32 = arith.constant 0 : i32
    %c0_i32_0 = arith.constant 0 : i32
    %c0_i32_1 = arith.constant 0 : i32
    return %c0_i32, %c0_i32_0 : i32, i32
  }
  func.func @transform_5(%arg0: i32) -> (i32, i32) {
    %c0_i32 = arith.constant 0 : i32
    %c0_i32_0 = arith.constant 0 : i32
    %c0_i32_1 = arith.constant 0 : i32
    return %c0_i32, %c0_i32_0 : i32, i32
  }
  func.func @transform_6(%arg0: i32) -> (i32, i32) {
    %c0_i32 = arith.constant 0 : i32
    %c0_i32_0 = arith.constant 0 : i32
    %c0_i32_1 = arith.constant 0 : i32
    return %c0_i32, %c0_i32_0 : i32, i32
  }
  func.func @transform_7(%arg0: i32) -> (i32, i32) {
    %c0_i32 = arith.constant 0 : i32
    %c0_i32_0 = arith.constant 0 : i32
    %c0_i32_1 = arith.constant 0 : i32
    return %c0_i32, %c0_i32_0 : i32, i32
  }
  func.func @transform_8(%arg0: i32) -> (i32, i32) {
    %c0_i32 = arith.constant 0 : i32
    %c0_i32_0 = arith.constant 0 : i32
    %c0_i32_1 = arith.constant 0 : i32
    return %c0_i32, %c0_i32_0 : i32, i32
  }
  func.func @transform_9(%arg0: i32) -> (i32, i32) {
    %c0_i32 = arith.constant 0 : i32
    %c0_i32_0 = arith.constant 0 : i32
    return %arg0, %c0_i32 : i32, i32
  }
}

</mosaic_0001>

<llo_original>
// kernel: linear_nn_forward.1
$region0: #{linear_nn_forward.1}
  #allocation0 [shape = 'u32[]', space=smem, size = 0x4, offset = 0x4, fixed_abs, tag = 'smem constant byte address 0x4 - core index']
  #allocation1 [shape = 'u32[144,128]{1,0:T(1,128)}', space=vmem, size = 0x12000, scoped, tag = 'internal scratch']
  %s0 = inlined_call_operand.vmem [shape: bf16[256,32], index: 0, kind: input, shape index: {}]
  %s1 = inlined_call_operand.vmem [shape: bf16[32,128], index: 1, kind: input, shape index: {}]
  %s2 = inlined_call_operand.vmem [shape: bf16[1,128], index: 2, kind: input, shape index: {}]
  %s3 = inlined_call_operand.vmem [shape: bf16[128,128], index: 3, kind: input, shape index: {}]
  %s4 = inlined_call_operand.vmem [shape: bf16[1,128], index: 4, kind: input, shape index: {}]
  %s5 = inlined_call_operand.vmem [shape: bf16[128,64], index: 5, kind: input, shape index: {}]
  %s6 = inlined_call_operand.vmem [shape: bf16[1,64], index: 6, kind: input, shape index: {}]
  %s7 = inlined_call_operand.vmem [shape: bf16[64,128], index: 7, kind: input, shape index: {}]
  %s8 = inlined_call_operand.vmem [shape: f32[1,128], index: 8, kind: input, shape index: {}]
  %s9 = inlined_call_operand.vmem [shape: bf16[256,128], index: 9, kind: output, shape index: {}]
  %s10 = sld [smem:[#allocation0]]
  $region46: #{linear_nn_forward.1} parent=0
    _
  %s12 = ssub.s32 1, %s10
  %s13 = scalar_select 0, %s12, %s10
  // Predicated region
  $region2: #{linear_nn_forward.1} parent=0 // pred_check
    _
  $region3: #{linear_nn_forward.1} parent=0 // pred_check_branch
    %15 = sbr.rel (0) target = $region5
  $region4: #{linear_nn_forward.1} parent=0 // pred_region
    _
  $region5: #{linear_nn_forward.1} parent=0 // pred_fallthru
    _
  // Predicated region
  $region6: #{linear_nn_forward.1} parent=0 // pred_check
    _
  $region7: #{linear_nn_forward.1} parent=0 // pred_check_branch
    %17 = sbr.rel (0) target = $region9
  $region8: #{linear_nn_forward.1} parent=0 // pred_region
    _
  $region9: #{linear_nn_forward.1} parent=0 // pred_fallthru
    _
  // Predicated region
  $region10: #{linear_nn_forward.1} parent=0 // pred_check
    _
  $region11: #{linear_nn_forward.1} parent=0 // pred_check_branch
    %19 = sbr.rel (0) target = $region13
  $region12: #{linear_nn_forward.1} parent=0 // pred_region
    _
  $region13: #{linear_nn_forward.1} parent=0 // pred_fallthru
    _
  // Predicated region
  $region14: #{linear_nn_forward.1} parent=0 // pred_check
    _
  $region15: #{linear_nn_forward.1} parent=0 // pred_check_branch
    %21 = sbr.rel (0) target = $region17
  $region16: #{linear_nn_forward.1} parent=0 // pred_region
    _
  $region17: #{linear_nn_forward.1} parent=0 // pred_fallthru
    _
  // Predicated region
  $region18: #{linear_nn_forward.1} parent=0 // pred_check
    _
  $region19: #{linear_nn_forward.1} parent=0 // pred_check_branch
    %23 = sbr.rel (0) target = $region21
  $region20: #{linear_nn_forward.1} parent=0 // pred_region
    _
  $region21: #{linear_nn_forward.1} parent=0 // pred_fallthru
    _
  // Predicated region
  $region22: #{linear_nn_forward.1} parent=0 // pred_check
    _
  $region23: #{linear_nn_forward.1} parent=0 // pred_check_branch
    %25 = sbr.rel (0) target = $region25
  $region24: #{linear_nn_forward.1} parent=0 // pred_region
    _
  $region25: #{linear_nn_forward.1} parent=0 // pred_fallthru
    _
  // Predicated region
  $region26: #{linear_nn_forward.1} parent=0 // pred_check
    _
  $region27: #{linear_nn_forward.1} parent=0 // pred_check_branch
    %27 = sbr.rel (0) target = $region29
  $region28: #{linear_nn_forward.1} parent=0 // pred_region
    _
  $region29: #{linear_nn_forward.1} parent=0 // pred_fallthru
    _
  // Predicated region
  $region30: #{linear_nn_forward.1} parent=0 // pred_check
    _
  $region31: #{linear_nn_forward.1} parent=0 // pred_check_branch
    %29 = sbr.rel (0) target = $region33
  $region32: #{linear_nn_forward.1} parent=0 // pred_region
    _
  $region33: #{linear_nn_forward.1} parent=0 // pred_fallthru
    _
  // Predicated region
  $region34: #{linear_nn_forward.1} parent=0 // pred_check
    _
  $region35: #{linear_nn_forward.1} parent=0 // pred_check_branch
    %31 = sbr.rel (0) target = $region37
  $region36: #{linear_nn_forward.1} parent=0 // pred_region
    _
  $region37: #{linear_nn_forward.1} parent=0 // pred_fallthru
    _
  %v33 = vld [vmem:[%s0] sm:$0xf]
  %v34 = vld [vmem:[%s0 + $0x4] sm:$0xf]
  %v35 = vld [vmem:[%s0 + $0x8] sm:$0xf]
  %v36 = vld [vmem:[%s0 + $0xc] sm:$0xf]
  %v37 = vld [vmem:[%s0 + $0x10] sm:$0xf]
  %v38 = vld [vmem:[%s0 + $0x14] sm:$0xf]
  %v39 = vld [vmem:[%s0 + $0x18] sm:$0xf]
  %v40 = vld [vmem:[%s0 + $0x1c] sm:$0xf]
  %v41 = vld [vmem:[%s0 + $0x20] sm:$0xf]
  %v42 = vld [vmem:[%s0 + $0x24] sm:$0xf]
  %v43 = vld [vmem:[%s0 + $0x28] sm:$0xf]
  %v44 = vld [vmem:[%s0 + $0x2c] sm:$0xf]
  %v45 = vld [vmem:[%s0 + $0x30] sm:$0xf]
  %v46 = vld [vmem:[%s0 + $0x34] sm:$0xf]
  %v47 = vld [vmem:[%s0 + $0x38] sm:$0xf]
  %v48 = vld [vmem:[%s0 + $0x3c] sm:$0xf]
  %v49 = vld [vmem:[%s0 + $0x40] sm:$0xf]
  %v50 = vld [vmem:[%s0 + $0x44] sm:$0xf]
  %v51 = vld [vmem:[%s0 + $0x48] sm:$0xf]
  %v52 = vld [vmem:[%s0 + $0x4c] sm:$0xf]
  %v53 = vld [vmem:[%s0 + $0x50] sm:$0xf]
  %v54 = vld [vmem:[%s0 + $0x54] sm:$0xf]
  %v55 = vld [vmem:[%s0 + $0x58] sm:$0xf]
  %v56 = vld [vmem:[%s0 + $0x5c] sm:$0xf]
  %v57 = vld [vmem:[%s0 + $0x60] sm:$0xf]
  %v58 = vld [vmem:[%s0 + $0x64] sm:$0xf]
  %v59 = vld [vmem:[%s0 + $0x68] sm:$0xf]
  %v60 = vld [vmem:[%s0 + $0x6c] sm:$0xf]
  %v61 = vld [vmem:[%s0 + $0x70] sm:$0xf]
  %v62 = vld [vmem:[%s0 + $0x74] sm:$0xf]
  %v63 = vld [vmem:[%s0 + $0x78] sm:$0xf]
  %v64 = vld [vmem:[%s0 + $0x7c] sm:$0xf]
  %v65 = vld [vmem:[%s1] sm:$0xf]
  %v66 = vld [vmem:[%s1 + $0x4] sm:$0xf]
  %v67 = vld [vmem:[%s1 + $0x8] sm:$0xf]
  %v68 = vld [vmem:[%s1 + $0xc] sm:$0xf]
  %v101 = vunpack.c.l.b16 %v33
  %v102 = vunpack.c.l.b16 %v34
  %v103 = vunpack.c.l.b16 %v35
  %v104 = vunpack.c.l.b16 %v36
  %v105 = vunpack.c.l.b16 %v37
  %v106 = vunpack.c.l.b16 %v38
  %v107 = vunpack.c.l.b16 %v39
  %v108 = vunpack.c.l.b16 %v40
  %v109 = vunpack.c.l.b16 %v41
  %v110 = vunpack.c.l.b16 %v42
  %v111 = vunpack.c.l.b16 %v43
  %v112 = vunpack.c.l.b16 %v44
  %v113 = vunpack.c.l.b16 %v45
  %v114 = vunpack.c.l.b16 %v46
  %v115 = vunpack.c.l.b16 %v47
  %v116 = vunpack.c.l.b16 %v48
  %v117 = vunpack.c.l.b16 %v49
  %v118 = vunpack.c.l.b16 %v50
  %v119 = vunpack.c.l.b16 %v51
  %v120 = vunpack.c.l.b16 %v52
  %v121 = vunpack.c.l.b16 %v53
  %v122 = vunpack.c.l.b16 %v54
  %v123 = vunpack.c.l.b16 %v55
  %v124 = vunpack.c.l.b16 %v56
  %v125 = vunpack.c.l.b16 %v57
  %v126 = vunpack.c.l.b16 %v58
  %v127 = vunpack.c.l.b16 %v59
  %v128 = vunpack.c.l.b16 %v60
  %v129 = vunpack.c.l.b16 %v61
  %v130 = vunpack.c.l.b16 %v62
  %v131 = vunpack.c.l.b16 %v63
  %v132 = vunpack.c.l.b16 %v64
  %v133 = vpack.c.b16 %v102, %v101
  %v134 = vpack.c.b16 %v104, %v103
  %v135 = vpack.c.b16 %v106, %v105
  %v136 = vpack.c.b16 %v108, %v107
  %v137 = vpack.c.b16 %v110, %v109
  %v138 = vpack.c.b16 %v112, %v111
  %v139 = vpack.c.b16 %v114, %v113
  %v140 = vpack.c.b16 %v116, %v115
  %v141 = vpack.c.b16 %v118, %v117
  %v142 = vpack.c.b16 %v120, %v119
  %v143 = vpack.c.b16 %v122, %v121
  %v144 = vpack.c.b16 %v124, %v123
  %v145 = vpack.c.b16 %v126, %v125
  %v146 = vpack.c.b16 %v128, %v127
  %v147 = vpack.c.b16 %v130, %v129
  %v148 = vpack.c.b16 %v132, %v131
  %v153 = vunpack.c.l.b16 %v65
  %v154 = vunpack.c.l.b16 %v66
  %v155 = vunpack.c.l.b16 %v67
  %v156 = vunpack.c.l.b16 %v68
  %v157 = vpack.c.b16 %v154, %v153
  %v158 = vpack.c.b16 %v156, %v155
  %vm161 = vcmask 261120
  %v163 = vsel %vm161, %v133, 0
  %v166 = vsel %vm161, %v134, 0
  %v169 = vsel %vm161, %v135, 0
  %v172 = vsel %vm161, %v136, 0
  %v175 = vsel %vm161, %v137, 0
  %v178 = vsel %vm161, %v138, 0
  %v181 = vsel %vm161, %v139, 0
  %v184 = vsel %vm161, %v140, 0
  %v187 = vsel %vm161, %v141, 0
  %v190 = vsel %vm161, %v142, 0
  %v193 = vsel %vm161, %v143, 0
  %v196 = vsel %vm161, %v144, 0
  %v199 = vsel %vm161, %v145, 0
  %v202 = vsel %vm161, %v146, 0
  %v205 = vsel %vm161, %v147, 0
  %v208 = vsel %vm161, %v148, 0
  %210 = vmatprep.subr.bf16.mxu0 0
  %211 = vmatpush1.bf16.msra.mxu0 %v157
  %212 = vmatprep.subr.bf16.mxu0 0
  %213 = vmatpush1.bf16.msra.mxu0 %v158
  %214 = vmatprep.subr.bf16.mxu0 0
  %215 = vmatpush1.bf16.msra.mxu0 0
  %216 = vmatprep.subr.bf16.mxu0 0
  %217 = vmatpush1.bf16.msra.mxu0 0
  %218 = vmatprep.subr.bf16.mxu0 0
  %219 = vmatpush1.bf16.msra.mxu0 0
  %220 = vmatprep.subr.bf16.mxu0 0
  %221 = vmatpush1.bf16.msra.mxu0 0
  %222 = vmatprep.subr.bf16.mxu0 0
  %223 = vmatpush1.bf16.msra.mxu0 0
  %224 = vmatprep.subr.bf16.mxu0 0
  %225 = vmatpush1.bf16.msra.mxu0 0
  %226 = vmatprep.subr.bf16.mxu0 0
  %227 = vmatpush1.bf16.msra.mxu0 0
  %228 = vmatprep.subr.bf16.mxu0 0
  %229 = vmatpush1.bf16.msra.mxu0 0
  %230 = vmatprep.subr.bf16.mxu0 0
  %231 = vmatpush1.bf16.msra.mxu0 0
  %232 = vmatprep.subr.bf16.mxu0 0
  %233 = vmatpush1.bf16.msra.mxu0 0
  %234 = vmatprep.subr.bf16.mxu0 0
  %235 = vmatpush1.bf16.msra.mxu0 0
  %236 = vmatprep.subr.bf16.mxu0 0
  %237 = vmatpush1.bf16.msra.mxu0 0
  %238 = vmatprep.subr.bf16.mxu0 0
  %239 = vmatpush1.bf16.msra.mxu0 0
  %240 = vmatprep.subr.bf16.mxu0 0
  %241 = vmatpush1.bf16.msra.mxu0 0
  %242 = vmatprep.mubr.bf16.mxu0 0
  %243 = vmatmul.mubr.bf16.gmra.mrb[0].mxu0 %v163
  %v244 = vpop.f32.mrb[0].mxu0
  %v245 = vadd.f32 0.0, %v244
  %v246 = vpop.f32.mrb[0].mxu0
  %v247 = vpop.f32.mrb[0].mxu0
  %v248 = vadd.f32 0.0, %v247
  %v249 = vpop.f32.mrb[0].mxu0
  %250 = vmatprep.mubr.bf16.mxu0 0
  %251 = vmatmul.mubr.bf16.gmra.mrb[0].mxu0 %v166
  %v252 = vpop.f32.mrb[0].mxu0
  %v253 = vadd.f32 0.0, %v252
  %v254 = vpop.f32.mrb[0].mxu0
  %v255 = vpop.f32.mrb[0].mxu0
  %v256 = vadd.f32 0.0, %v255
  %v257 = vpop.f32.mrb[0].mxu0
  %258 = vmatprep.mubr.bf16.mxu0 0
  %259 = vmatmul.mubr.bf16.gmra.mrb[0].mxu0 %v169
  %v260 = vpop.f32.mrb[0].mxu0
  %v261 = vadd.f32 0.0, %v260
  %v262 = vpop.f32.mrb[0].mxu0
  %v263 = vpop.f32.mrb[0].mxu0
  %v264 = vadd.f32 0.0, %v263
  %v265 = vpop.f32.mrb[0].mxu0
  %266 = vmatprep.mubr.bf16.mxu0 0
  %267 = vmatmul.mubr.bf16.gmra.mrb[0].mxu0 %v172
  %v268 = vpop.f32.mrb[0].mxu0
  %v269 = vadd.f32 0.0, %v268
  %v270 = vpop.f32.mrb[0].mxu0
  %v271 = vpop.f32.mrb[0].mxu0
  %v272 = vadd.f32 0.0, %v271
  %v273 = vpop.f32.mrb[0].mxu0
  %274 = vmatprep.mubr.bf16.mxu0 0
  %275 = vmatmul.mubr.bf16.gmra.mrb[0].mxu0 %v175
  %v276 = vpop.f32.mrb[0].mxu0
  %v277 = vadd.f32 0.0, %v276
  %v278 = vpop.f32.mrb[0].mxu0
  %v279 = vpop.f32.mrb[0].mxu0
  %v280 = vadd.f32 0.0, %v279
  %v281 = vpop.f32.mrb[0].mxu0
  %282 = vmatprep.mubr.bf16.mxu0 0
  %283 = vmatmul.mubr.bf16.gmra.mrb[0].mxu0 %v178
  %v284 = vpop.f32.mrb[0].mxu0
  %v285 = vadd.f32 0.0, %v284
  %v286 = vpop.f32.mrb[0].mxu0
  %v287 = vpop.f32.mrb[0].mxu0
  %v288 = vadd.f32 0.0, %v287
  %v289 = vpop.f32.mrb[0].mxu0
  %290 = vmatprep.mubr.bf16.mxu0 0
  %291 = vmatmul.mubr.bf16.gmra.mrb[0].mxu0 %v181
  %v292 = vpop.f32.mrb[0].mxu0
  %v293 = vadd.f32 0.0, %v292
  %v294 = vpop.f32.mrb[0].mxu0
  %v295 = vpop.f32.mrb[0].mxu0
  %v296 = vadd.f32 0.0, %v295
  %v297 = vpop.f32.mrb[0].mxu0
  %298 = vmatprep.mubr.bf16.mxu0 0
  %299 = vmatmul.mubr.bf16.gmra.mrb[0].mxu0 %v184
  %v300 = vpop.f32.mrb[0].mxu0
  %v301 = vadd.f32 0.0, %v300
  %v302 = vpop.f32.mrb[0].mxu0
  %v303 = vpop.f32.mrb[0].mxu0
  %v304 = vadd.f32 0.0, %v303
  %v305 = vpop.f32.mrb[0].mxu0
  %306 = vmatprep.mubr.bf16.mxu0 0
  %307 = vmatmul.mubr.bf16.gmra.mrb[0].mxu0 %v187
  %v308 = vpop.f32.mrb[0].mxu0
  %v309 = vadd.f32 0.0, %v308
  %v310 = vpop.f32.mrb[0].mxu0
  %v311 = vpop.f32.mrb[0].mxu0
  %v312 = vadd.f32 0.0, %v311
  %v313 = vpop.f32.mrb[0].mxu0
  %314 = vmatprep.mubr.bf16.mxu0 0
  %315 = vmatmul.mubr.bf16.gmra.mrb[0].mxu0 %v190
  %v316 = vpop.f32.mrb[0].mxu0
  %v317 = vadd.f32 0.0, %v316
  %v318 = vpop.f32.mrb[0].mxu0
  %v319 = vpop.f32.mrb[0].mxu0
  %v320 = vadd.f32 0.0, %v319
  %v321 = vpop.f32.mrb[0].mxu0
  %322 = vmatprep.mubr.bf16.mxu0 0
  %323 = vmatmul.mubr.bf16.gmra.mrb[0].mxu0 %v193
  %v324 = vpop.f32.mrb[0].mxu0
  %v325 = vadd.f32 0.0, %v324
  %v326 = vpop.f32.mrb[0].mxu0
  %v327 = vpop.f32.mrb[0].mxu0
  %v328 = vadd.f32 0.0, %v327
  %v329 = vpop.f32.mrb[0].mxu0
  %330 = vmatprep.mubr.bf16.mxu0 0
  %331 = vmatmul.mubr.bf16.gmra.mrb[0].mxu0 %v196
  %v332 = vpop.f32.mrb[0].mxu0
  %v333 = vadd.f32 0.0, %v332
  %v334 = vpop.f32.mrb[0].mxu0
  %v335 = vpop.f32.mrb[0].mxu0
  %v336 = vadd.f32 0.0, %v335
  %v337 = vpop.f32.mrb[0].mxu0
  %338 = vmatprep.mubr.bf16.mxu0 0
  %339 = vmatmul.mubr.bf16.gmra.mrb[0].mxu0 %v199
  %v340 = vpop.f32.mrb[0].mxu0
  %v341 = vadd.f32 0.0, %v340
  %v342 = vpop.f32.mrb[0].mxu0
  %v343 = vpop.f32.mrb[0].mxu0
  %v344 = vadd.f32 0.0, %v343
  %v345 = vpop.f32.mrb[0].mxu0
  %346 = vmatprep.mubr.bf16.mxu0 0
  %347 = vmatmul.mubr.bf16.gmra.mrb[0].mxu0 %v202
  %v348 = vpop.f32.mrb[0].mxu0
  %v349 = vadd.f32 0.0, %v348
  %v350 = vpop.f32.mrb[0].mxu0
  %v351 = vpop.f32.mrb[0].mxu0
  %v352 = vadd.f32 0.0, %v351
  %v353 = vpop.f32.mrb[0].mxu0
  %354 = vmatprep.mubr.bf16.mxu0 0
  %355 = vmatmul.mubr.bf16.gmra.mrb[0].mxu0 %v205
  %v356 = vpop.f32.mrb[0].mxu0
  %v357 = vadd.f32 0.0, %v356
  %v358 = vpop.f32.mrb[0].mxu0
  %v359 = vpop.f32.mrb[0].mxu0
  %v360 = vadd.f32 0.0, %v359
  %v361 = vpop.f32.mrb[0].mxu0
  %362 = vmatprep.mubr.bf16.mxu0 0
  %363 = vmatmul.mubr.bf16.gmra.mrb[0].mxu0 %v208
  %v364 = vpop.f32.mrb[0].mxu0
  %v365 = vadd.f32 0.0, %v364
  %v366 = vpop.f32.mrb[0].mxu0
  %v367 = vpop.f32.mrb[0].mxu0
  %v368 = vadd.f32 0.0, %v367
  %v369 = vpop.f32.mrb[0].mxu0
  %370 = vdwg.mxu0
  %v371 = vpack.c.bf16 %v248, %v245
  %v372 = vpack.c.bf16 %v256, %v253
  %v373 = vpack.c.bf16 %v264, %v261
  %v374 = vpack.c.bf16 %v272, %v269
  %v375 = vpack.c.bf16 %v280, %v277
  %v376 = vpack.c.bf16 %v288, %v285
  %v377 = vpack.c.bf16 %v296, %v293
  %v378 = vpack.c.bf16 %v304, %v301
  %v379 = vpack.c.bf16 %v312, %v309
  %v380 = vpack.c.bf16 %v320, %v317
  %v381 = vpack.c.bf16 %v328, %v325
  %v382 = vpack.c.bf16 %v336, %v333
  %v383 = vpack.c.bf16 %v344, %v341
  %v384 = vpack.c.bf16 %v352, %v349
  %v385 = vpack.c.bf16 %v360, %v357
  %v386 = vpack.c.bf16 %v368, %v365
  %v387 = vld [vmem:[%s2] sm:$0x1]
  %v389 = vpack.i.b16 %v387, %v387
  %v391 = vlaneseq
  %v392 = vshrl.u32 %v391, 7
  %v393 = vsub.s32 0, %v392
  %v394 = vrot.slane %v389, %v393
  %v395 = vadd.bf16 %v371, %v394
  %v396 = vadd.bf16 %v372, %v394
  %v397 = vadd.bf16 %v373, %v394
  %v398 = vadd.bf16 %v374, %v394
  %v399 = vadd.bf16 %v375, %v394
  %v400 = vadd.bf16 %v376, %v394
  %v401 = vadd.bf16 %v377, %v394
  %v402 = vadd.bf16 %v378, %v394
  %v403 = vadd.bf16 %v379, %v394
  %v404 = vadd.bf16 %v380, %v394
  %v405 = vadd.bf16 %v381, %v394
  %v406 = vadd.bf16 %v382, %v394
  %v407 = vadd.bf16 %v383, %v394
  %v408 = vadd.bf16 %v384, %v394
  %v409 = vadd.bf16 %v385, %v394
  %v410 = vadd.bf16 %v386, %v394
  %v411 = vmax.bf16 %v395, 0
  %v412 = vmax.bf16 %v396, 0
  %v413 = vmax.bf16 %v397, 0
  %v414 = vmax.bf16 %v398, 0
  %v415 = vmax.bf16 %v399, 0
  %v416 = vmax.bf16 %v400, 0
  %v417 = vmax.bf16 %v401, 0
  %v418 = vmax.bf16 %v402, 0
  %v419 = vmax.bf16 %v403, 0
  %v420 = vmax.bf16 %v404, 0
  %v421 = vmax.bf16 %v405, 0
  %v422 = vmax.bf16 %v406, 0
  %v423 = vmax.bf16 %v407, 0
  %v424 = vmax.bf16 %v408, 0
  %v425 = vmax.bf16 %v409, 0
  %v426 = vmax.bf16 %v410, 0
  %v427 = vld [vmem:[%s3] sm:$0xf]
  %v428 = vld [vmem:[%s3 + $0x4] sm:$0xf]
  %v429 = vld [vmem:[%s3 + $0x8] sm:$0xf]
  %v430 = vld [vmem:[%s3 + $0xc] sm:$0xf]
  %v431 = vld [vmem:[%s3 + $0x10] sm:$0xf]
  %v432 = vld [vmem:[%s3 + $0x14] sm:$0xf]
  %v433 = vld [vmem:[%s3 + $0x18] sm:$0xf]
  %v434 = vld [vmem:[%s3 + $0x1c] sm:$0xf]
  %v435 = vld [vmem:[%s3 + $0x20] sm:$0xf]
  %v436 = vld [vmem:[%s3 + $0x24] sm:$0xf]
  %v437 = vld [vmem:[%s3 + $0x28] sm:$0xf]
  %v438 = vld [vmem:[%s3 + $0x2c] sm:$0xf]
  %v439 = vld [vmem:[%s3 + $0x30] sm:$0xf]
  %v440 = vld [vmem:[%s3 + $0x34] sm:$0xf]
  %v441 = vld [vmem:[%s3 + $0x38] sm:$0xf]
  %v442 = vld [vmem:[%s3 + $0x3c] sm:$0xf]
  %v459 = vunpack.c.l.b16 %v427
  %v460 = vunpack.c.l.b16 %v428
  %v461 = vunpack.c.l.b16 %v429
  %v462 = vunpack.c.l.b16 %v430
  %v463 = vunpack.c.l.b16 %v431
  %v464 = vunpack.c.l.b16 %v432
  %v465 = vunpack.c.l.b16 %v433
  %v466 = vunpack.c.l.b16 %v434
  %v467 = vunpack.c.l.b16 %v435
  %v468 = vunpack.c.l.b16 %v436
  %v469 = vunpack.c.l.b16 %v437
  %v470 = vunpack.c.l.b16 %v438
  %v471 = vunpack.c.l.b16 %v439
  %v472 = vunpack.c.l.b16 %v440
  %v473 = vunpack.c.l.b16 %v441
  %v474 = vunpack.c.l.b16 %v442
  %v475 = vpack.c.b16 %v460, %v459
  %v476 = vpack.c.b16 %v462, %v461
  %v477 = vpack.c.b16 %v464, %v463
  %v478 = vpack.c.b16 %v466, %v465
  %v479 = vpack.c.b16 %v468, %v467
  %v480 = vpack.c.b16 %v470, %v469
  %v481 = vpack.c.b16 %v472, %v471
  %v482 = vpack.c.b16 %v474, %v473
  %491 = vmatprep.subr.bf16.mxu0 0
  %492 = vmatpush1.bf16.msra.mxu0 %v475
  %493 = vmatprep.subr.bf16.mxu0 0
  %494 = vmatpush1.bf16.msra.mxu0 %v476
  %495 = vmatprep.subr.bf16.mxu0 0
  %496 = vmatpush1.bf16.msra.mxu0 %v477
  %497 = vmatprep.subr.bf16.mxu0 0
  %498 = vmatpush1.bf16.msra.mxu0 %v478
  %499 = vmatprep.subr.bf16.mxu0 0
  %500 = vmatpush1.bf16.msra.mxu0 %v479
  %501 = vmatprep.subr.bf16.mxu0 0
  %502 = vmatpush1.bf16.msra.mxu0 %v480
  %503 = vmatprep.subr.bf16.mxu0 0
  %504 = vmatpush1.bf16.msra.mxu0 %v481
  %505 = vmatprep.subr.bf16.mxu0 0
  %506 = vmatpush1.bf16.msra.mxu0 %v482
  %507 = vmatprep.subr.bf16.mxu0 0
  %508 = vmatpush1.bf16.msra.mxu0 0
  %509 = vmatprep.subr.bf16.mxu0 0
  %510 = vmatpush1.bf16.msra.mxu0 0
  %511 = vmatprep.subr.bf16.mxu0 0
  %512 = vmatpush1.bf16.msra.mxu0 0
  %513 = vmatprep.subr.bf16.mxu0 0
  %514 = vmatpush1.bf16.msra.mxu0 0
  %515 = vmatprep.subr.bf16.mxu0 0
  %516 = vmatpush1.bf16.msra.mxu0 0
  %517 = vmatprep.subr.bf16.mxu0 0
  %518 = vmatpush1.bf16.msra.mxu0 0
  %519 = vmatprep.subr.bf16.mxu0 0
  %520 = vmatpush1.bf16.msra.mxu0 0
  %521 = vmatprep.subr.bf16.mxu0 0
  %522 = vmatpush1.bf16.msra.mxu0 0
  %523 = vmatprep.mubr.bf16.mxu0 0
  %524 = vmatmul.mubr.bf16.gmra.mrb[0].mxu0 %v411
  %v525 = vpop.f32.mrb[0].mxu0
  %v526 = vadd.f32 0.0, %v525
  %v527 = vpop.f32.mrb[0].mxu0
  %v528 = vpop.f32.mrb[0].mxu0
  %v529 = vadd.f32 0.0, %v528
  %v530 = vpop.f32.mrb[0].mxu0
  %531 = vmatprep.mubr.bf16.mxu0 0
  %532 = vmatmul.mubr.bf16.gmra.mrb[0].mxu0 %v412
  %v533 = vpop.f32.mrb[0].mxu0
  %v534 = vadd.f32 0.0, %v533
  %v535 = vpop.f32.mrb[0].mxu0
  %v536 = vpop.f32.mrb[0].mxu0
  %v537 = vadd.f32 0.0, %v536
  %v538 = vpop.f32.mrb[0].mxu0
  %539 = vmatprep.mubr.bf16.mxu0 0
  %540 = vmatmul.mubr.bf16.gmra.mrb[0].mxu0 %v413
  %v541 = vpop.f32.mrb[0].mxu0
  %v542 = vadd.f32 0.0, %v541
  %v543 = vpop.f32.mrb[0].mxu0
  %v544 = vpop.f32.mrb[0].mxu0
  %v545 = vadd.f32 0.0, %v544
  %v546 = vpop.f32.mrb[0].mxu0
  %547 = vmatprep.mubr.bf16.mxu0 0
  %548 = vmatmul.mubr.bf16.gmra.mrb[0].mxu0 %v414
  %v549 = vpop.f32.mrb[0].mxu0
  %v550 = vadd.f32 0.0, %v549
  %v551 = vpop.f32.mrb[0].mxu0
  %v552 = vpop.f32.mrb[0].mxu0
  %v553 = vadd.f32 0.0, %v552
  %v554 = vpop.f32.mrb[0].mxu0
  %555 = vmatprep.mubr.bf16.mxu0 0
  %556 = vmatmul.mubr.bf16.gmra.mrb[0].mxu0 %v415
  %v557 = vpop.f32.mrb[0].mxu0
  %v558 = vadd.f32 0.0, %v557
  %v559 = vpop.f32.mrb[0].mxu0
  %v560 = vpop.f32.mrb[0].mxu0
  %v561 = vadd.f32 0.0, %v560
  %v562 = vpop.f32.mrb[0].mxu0
  %563 = vmatprep.mubr.bf16.mxu0 0
  %564 = vmatmul.mubr.bf16.gmra.mrb[0].mxu0 %v416
  %v565 = vpop.f32.mrb[0].mxu0
  %v566 = vadd.f32 0.0, %v565
  %v567 = vpop.f32.mrb[0].mxu0
  %v568 = vpop.f32.mrb[0].mxu0
  %v569 = vadd.f32 0.0, %v568
  %v570 = vpop.f32.mrb[0].mxu0
  %571 = vmatprep.mubr.bf16.mxu0 0
  %572 = vmatmul.mubr.bf16.gmra.mrb[0].mxu0 %v417
  %v573 = vpop.f32.mrb[0].mxu0
  %v574 = vadd.f32 0.0, %v573
  %v575 = vpop.f32.mrb[0].mxu0
  %v576 = vpop.f32.mrb[0].mxu0
  %v577 = vadd.f32 0.0, %v576
  %v578 = vpop.f32.mrb[0].mxu0
  %579 = vmatprep.mubr.bf16.mxu0 0
  %580 = vmatmul.mubr.bf16.gmra.mrb[0].mxu0 %v418
  %v581 = vpop.f32.mrb[0].mxu0
  %v582 = vadd.f32 0.0, %v581
  %v583 = vpop.f32.mrb[0].mxu0
  %v584 = vpop.f32.mrb[0].mxu0
  %v585 = vadd.f32 0.0, %v584
  %v586 = vpop.f32.mrb[0].mxu0
  %587 = vmatprep.mubr.bf16.mxu0 0
  %588 = vmatmul.mubr.bf16.gmra.mrb[0].mxu0 %v419
  %v589 = vpop.f32.mrb[0].mxu0
  %v590 = vadd.f32 0.0, %v589
  %v591 = vpop.f32.mrb[0].mxu0
  %v592 = vpop.f32.mrb[0].mxu0
  %v593 = vadd.f32 0.0, %v592
  %v594 = vpop.f32.mrb[0].mxu0
  %595 = vmatprep.mubr.bf16.mxu0 0
  %596 = vmatmul.mubr.bf16.gmra.mrb[0].mxu0 %v420
  %v597 = vpop.f32.mrb[0].mxu0
  %v598 = vadd.f32 0.0, %v597
  %v599 = vpop.f32.mrb[0].mxu0
  %v600 = vpop.f32.mrb[0].mxu0
  %v601 = vadd.f32 0.0, %v600
  %v602 = vpop.f32.mrb[0].mxu0
  %603 = vmatprep.mubr.bf16.mxu0 0
  %604 = vmatmul.mubr.bf16.gmra.mrb[0].mxu0 %v421
  %v605 = vpop.f32.mrb[0].mxu0
  %v606 = vadd.f32 0.0, %v605
  %v607 = vpop.f32.mrb[0].mxu0
  %v608 = vpop.f32.mrb[0].mxu0
  %v609 = vadd.f32 0.0, %v608
  %v610 = vpop.f32.mrb[0].mxu0
  %611 = vmatprep.mubr.bf16.mxu0 0
  %612 = vmatmul.mubr.bf16.gmra.mrb[0].mxu0 %v422
  %v613 = vpop.f32.mrb[0].mxu0
  %v614 = vadd.f32 0.0, %v613
  %v615 = vpop.f32.mrb[0].mxu0
  %v616 = vpop.f32.mrb[0].mxu0
  %v617 = vadd.f32 0.0, %v616
  %v618 = vpop.f32.mrb[0].mxu0
  %619 = vmatprep.mubr.bf16.mxu0 0
  %620 = vmatmul.mubr.bf16.gmra.mrb[0].mxu0 %v423
  %v621 = vpop.f32.mrb[0].mxu0
  %v622 = vadd.f32 0.0, %v621
  %v623 = vpop.f32.mrb[0].mxu0
  %v624 = vpop.f32.mrb[0].mxu0
  %v625 = vadd.f32 0.0, %v624
  %v626 = vpop.f32.mrb[0].mxu0
  %627 = vmatprep.mubr.bf16.mxu0 0
  %628 = vmatmul.mubr.bf16.gmra.mrb[0].mxu0 %v424
  %v629 = vpop.f32.mrb[0].mxu0
  %v630 = vadd.f32 0.0, %v629
  %v631 = vpop.f32.mrb[0].mxu0
  %v632 = vpop.f32.mrb[0].mxu0
  %v633 = vadd.f32 0.0, %v632
  %v634 = vpop.f32.mrb[0].mxu0
  %635 = vmatprep.mubr.bf16.mxu0 0
  %636 = vmatmul.mubr.bf16.gmra.mrb[0].mxu0 %v425
  %v637 = vpop.f32.mrb[0].mxu0
  %v638 = vadd.f32 0.0, %v637
  %v639 = vpop.f32.mrb[0].mxu0
  %v640 = vpop.f32.mrb[0].mxu0
  %v641 = vadd.f32 0.0, %v640
  %v642 = vpop.f32.mrb[0].mxu0
  %643 = vmatprep.mubr.bf16.mxu0 0
  %644 = vmatmul.mubr.bf16.gmra.mrb[0].mxu0 %v426
  %v645 = vpop.f32.mrb[0].mxu0
  %v646 = vadd.f32 0.0, %v645
  %v647 = vpop.f32.mrb[0].mxu0
  %v648 = vpop.f32.mrb[0].mxu0
  %v649 = vadd.f32 0.0, %v648
  %v650 = vpop.f32.mrb[0].mxu0
  %651 = vdwg.mxu0
  %v652 = vpack.c.bf16 %v529, %v526
  %v653 = vpack.c.bf16 %v537, %v534
  %v654 = vpack.c.bf16 %v545, %v542
  %v655 = vpack.c.bf16 %v553, %v550
  %v656 = vpack.c.bf16 %v561, %v558
  %v657 = vpack.c.bf16 %v569, %v566
  %v658 = vpack.c.bf16 %v577, %v574
  %v659 = vpack.c.bf16 %v585, %v582
  %v660 = vpack.c.bf16 %v593, %v590
  %v661 = vpack.c.bf16 %v601, %v598
  %v662 = vpack.c.bf16 %v609, %v606
  %v663 = vpack.c.bf16 %v617, %v614
  %v664 = vpack.c.bf16 %v625, %v622
  %v665 = vpack.c.bf16 %v633, %v630
  %v666 = vpack.c.bf16 %v641, %v638
  %v667 = vpack.c.bf16 %v649, %v646
  %v668 = vld [vmem:[%s4] sm:$0x1]
  %v670 = vpack.i.b16 %v668, %v668
  %v672 = vlaneseq
  %v673 = vshrl.u32 %v672, 7
  %v674 = vsub.s32 0, %v673
  %v675 = vrot.slane %v670, %v674
  %v676 = vadd.bf16 %v652, %v675
  %v677 = vadd.bf16 %v653, %v675
  %v678 = vadd.bf16 %v654, %v675
  %v679 = vadd.bf16 %v655, %v675
  %v680 = vadd.bf16 %v656, %v675
  %v681 = vadd.bf16 %v657, %v675
  %v682 = vadd.bf16 %v658, %v675
  %v683 = vadd.bf16 %v659, %v675
  %v684 = vadd.bf16 %v660, %v675
  %v685 = vadd.bf16 %v661, %v675
  %v686 = vadd.bf16 %v662, %v675
  %v687 = vadd.bf16 %v663, %v675
  %v688 = vadd.bf16 %v664, %v675
  %v689 = vadd.bf16 %v665, %v675
  %v690 = vadd.bf16 %v666, %v675
  %v691 = vadd.bf16 %v667, %v675
  %v692 = vmax.bf16 %v676, 0
  %v693 = vmax.bf16 %v677, 0
  %v694 = vmax.bf16 %v678, 0
  %v695 = vmax.bf16 %v679, 0
  %v696 = vmax.bf16 %v680, 0
  %v697 = vmax.bf16 %v681, 0
  %v698 = vmax.bf16 %v682, 0
  %v699 = vmax.bf16 %v683, 0
  %v700 = vmax.bf16 %v684, 0
  %v701 = vmax.bf16 %v685, 0
  %v702 = vmax.bf16 %v686, 0
  %v703 = vmax.bf16 %v687, 0
  %v704 = vmax.bf16 %v688, 0
  %v705 = vmax.bf16 %v689, 0
  %v706 = vmax.bf16 %v690, 0
  %v707 = vmax.bf16 %v691, 0
  %v708 = vld [vmem:[%s5] sm:$0xf]
  %v709 = vld [vmem:[%s5 + $0x4] sm:$0xf]
  %v710 = vld [vmem:[%s5 + $0x8] sm:$0xf]
  %v711 = vld [vmem:[%s5 + $0xc] sm:$0xf]
  %v712 = vld [vmem:[%s5 + $0x10] sm:$0xf]
  %v713 = vld [vmem:[%s5 + $0x14] sm:$0xf]
  %v714 = vld [vmem:[%s5 + $0x18] sm:$0xf]
  %v715 = vld [vmem:[%s5 + $0x1c] sm:$0xf]
  %v716 = vld [vmem:[%s5 + $0x20] sm:$0xf]
  %v717 = vld [vmem:[%s5 + $0x24] sm:$0xf]
  %v718 = vld [vmem:[%s5 + $0x28] sm:$0xf]
  %v719 = vld [vmem:[%s5 + $0x2c] sm:$0xf]
  %v720 = vld [vmem:[%s5 + $0x30] sm:$0xf]
  %v721 = vld [vmem:[%s5 + $0x34] sm:$0xf]
  %v722 = vld [vmem:[%s5 + $0x38] sm:$0xf]
  %v723 = vld [vmem:[%s5 + $0x3c] sm:$0xf]
  %v740 = vunpack.c.l.b16 %v708
  %v741 = vunpack.c.l.b16 %v709
  %v742 = vunpack.c.l.b16 %v710
  %v743 = vunpack.c.l.b16 %v711
  %v744 = vunpack.c.l.b16 %v712
  %v745 = vunpack.c.l.b16 %v713
  %v746 = vunpack.c.l.b16 %v714
  %v747 = vunpack.c.l.b16 %v715
  %v748 = vunpack.c.l.b16 %v716
  %v749 = vunpack.c.l.b16 %v717
  %v750 = vunpack.c.l.b16 %v718
  %v751 = vunpack.c.l.b16 %v719
  %v752 = vunpack.c.l.b16 %v720
  %v753 = vunpack.c.l.b16 %v721
  %v754 = vunpack.c.l.b16 %v722
  %v755 = vunpack.c.l.b16 %v723
  %v756 = vpack.c.b16 %v741, %v740
  %v757 = vpack.c.b16 %v743, %v742
  %v758 = vpack.c.b16 %v745, %v744
  %v759 = vpack.c.b16 %v747, %v746
  %v760 = vpack.c.b16 %v749, %v748
  %v761 = vpack.c.b16 %v751, %v750
  %v762 = vpack.c.b16 %v753, %v752
  %v763 = vpack.c.b16 %v755, %v754
  %772 = vmatprep.subr.bf16.mxu0 0
  %773 = vmatpush1.bf16.msra.mxu0 %v756
  %774 = vmatprep.subr.bf16.mxu0 0
  %775 = vmatpush1.bf16.msra.mxu0 %v757
  %776 = vmatprep.subr.bf16.mxu0 0
  %777 = vmatpush1.bf16.msra.mxu0 %v758
  %778 = vmatprep.subr.bf16.mxu0 0
  %779 = vmatpush1.bf16.msra.mxu0 %v759
  %780 = vmatprep.subr.bf16.mxu0 0
  %781 = vmatpush1.bf16.msra.mxu0 %v760
  %782 = vmatprep.subr.bf16.mxu0 0
  %783 = vmatpush1.bf16.msra.mxu0 %v761
  %784 = vmatprep.subr.bf16.mxu0 0
  %785 = vmatpush1.bf16.msra.mxu0 %v762
  %786 = vmatprep.subr.bf16.mxu0 0
  %787 = vmatpush1.bf16.msra.mxu0 %v763
  %788 = vmatprep.subr.bf16.mxu0 0
  %789 = vmatpush1.bf16.msra.mxu0 0
  %790 = vmatprep.subr.bf16.mxu0 0
  %791 = vmatpush1.bf16.msra.mxu0 0
  %792 = vmatprep.subr.bf16.mxu0 0
  %793 = vmatpush1.bf16.msra.mxu0 0
  %794 = vmatprep.subr.bf16.mxu0 0
  %795 = vmatpush1.bf16.msra.mxu0 0
  %796 = vmatprep.subr.bf16.mxu0 0
  %797 = vmatpush1.bf16.msra.mxu0 0
  %798 = vmatprep.subr.bf16.mxu0 0
  %799 = vmatpush1.bf16.msra.mxu0 0
  %800 = vmatprep.subr.bf16.mxu0 0
  %801 = vmatpush1.bf16.msra.mxu0 0
  %802 = vmatprep.subr.bf16.mxu0 0
  %803 = vmatpush1.bf16.msra.mxu0 0
  %804 = vmatprep.mubr.bf16.mxu0 0
  %805 = vmatmul.mubr.bf16.gmra.mrb[0].mxu0 %v692
  %v806 = vpop.f32.mrb[0].mxu0
  %v807 = vadd.f32 0.0, %v806
  %v808 = vpop.f32.mrb[0].mxu0
  %v809 = vpop.f32.mrb[0].mxu0
  %v810 = vadd.f32 0.0, %v809
  %v811 = vpop.f32.mrb[0].mxu0
  %812 = vmatprep.mubr.bf16.mxu0 0
  %813 = vmatmul.mubr.bf16.gmra.mrb[0].mxu0 %v693
  %v814 = vpop.f32.mrb[0].mxu0
  %v815 = vadd.f32 0.0, %v814
  %v816 = vpop.f32.mrb[0].mxu0
  %v817 = vpop.f32.mrb[0].mxu0
  %v818 = vadd.f32 0.0, %v817
  %v819 = vpop.f32.mrb[0].mxu0
  %820 = vmatprep.mubr.bf16.mxu0 0
  %821 = vmatmul.mubr.bf16.gmra.mrb[0].mxu0 %v694
  %v822 = vpop.f32.mrb[0].mxu0
  %v823 = vadd.f32 0.0, %v822
  %v824 = vpop.f32.mrb[0].mxu0
  %v825 = vpop.f32.mrb[0].mxu0
  %v826 = vadd.f32 0.0, %v825
  %v827 = vpop.f32.mrb[0].mxu0
  %828 = vmatprep.mubr.bf16.mxu0 0
  %829 = vmatmul.mubr.bf16.gmra.mrb[0].mxu0 %v695
  %v830 = vpop.f32.mrb[0].mxu0
  %v831 = vadd.f32 0.0, %v830
  %v832 = vpop.f32.mrb[0].mxu0
  %v833 = vpop.f32.mrb[0].mxu0
  %v834 = vadd.f32 0.0, %v833
  %v835 = vpop.f32.mrb[0].mxu0
  %836 = vmatprep.mubr.bf16.mxu0 0
  %837 = vmatmul.mubr.bf16.gmra.mrb[0].mxu0 %v696
  %v838 = vpop.f32.mrb[0].mxu0
  %v839 = vadd.f32 0.0, %v838
  %v840 = vpop.f32.mrb[0].mxu0
  %v841 = vpop.f32.mrb[0].mxu0
  %v842 = vadd.f32 0.0, %v841
  %v843 = vpop.f32.mrb[0].mxu0
  %844 = vmatprep.mubr.bf16.mxu0 0
  %845 = vmatmul.mubr.bf16.gmra.mrb[0].mxu0 %v697
  %v846 = vpop.f32.mrb[0].mxu0
  %v847 = vadd.f32 0.0, %v846
  %v848 = vpop.f32.mrb[0].mxu0
  %v849 = vpop.f32.mrb[0].mxu0
  %v850 = vadd.f32 0.0, %v849
  %v851 = vpop.f32.mrb[0].mxu0
  %852 = vmatprep.mubr.bf16.mxu0 0
  %853 = vmatmul.mubr.bf16.gmra.mrb[0].mxu0 %v698
  %v854 = vpop.f32.mrb[0].mxu0
  %v855 = vadd.f32 0.0, %v854
  %v856 = vpop.f32.mrb[0].mxu0
  %v857 = vpop.f32.mrb[0].mxu0
  %v858 = vadd.f32 0.0, %v857
  %v859 = vpop.f32.mrb[0].mxu0
  %860 = vmatprep.mubr.bf16.mxu0 0
  %861 = vmatmul.mubr.bf16.gmra.mrb[0].mxu0 %v699
  %v862 = vpop.f32.mrb[0].mxu0
  %v863 = vadd.f32 0.0, %v862
  %v864 = vpop.f32.mrb[0].mxu0
  %v865 = vpop.f32.mrb[0].mxu0
  %v866 = vadd.f32 0.0, %v865
  %v867 = vpop.f32.mrb[0].mxu0
  %868 = vmatprep.mubr.bf16.mxu0 0
  %869 = vmatmul.mubr.bf16.gmra.mrb[0].mxu0 %v700
  %v870 = vpop.f32.mrb[0].mxu0
  %v871 = vadd.f32 0.0, %v870
  %v872 = vpop.f32.mrb[0].mxu0
  %v873 = vpop.f32.mrb[0].mxu0
  %v874 = vadd.f32 0.0, %v873
  %v875 = vpop.f32.mrb[0].mxu0
  %876 = vmatprep.mubr.bf16.mxu0 0
  %877 = vmatmul.mubr.bf16.gmra.mrb[0].mxu0 %v701
  %v878 = vpop.f32.mrb[0].mxu0
  %v879 = vadd.f32 0.0, %v878
  %v880 = vpop.f32.mrb[0].mxu0
  %v881 = vpop.f32.mrb[0].mxu0
  %v882 = vadd.f32 0.0, %v881
  %v883 = vpop.f32.mrb[0].mxu0
  %884 = vmatprep.mubr.bf16.mxu0 0
  %885 = vmatmul.mubr.bf16.gmra.mrb[0].mxu0 %v702
  %v886 = vpop.f32.mrb[0].mxu0
  %v887 = vadd.f32 0.0, %v886
  %v888 = vpop.f32.mrb[0].mxu0
  %v889 = vpop.f32.mrb[0].mxu0
  %v890 = vadd.f32 0.0, %v889
  %v891 = vpop.f32.mrb[0].mxu0
  %892 = vmatprep.mubr.bf16.mxu0 0
  %893 = vmatmul.mubr.bf16.gmra.mrb[0].mxu0 %v703
  %v894 = vpop.f32.mrb[0].mxu0
  %v895 = vadd.f32 0.0, %v894
  %v896 = vpop.f32.mrb[0].mxu0
  %v897 = vpop.f32.mrb[0].mxu0
  %v898 = vadd.f32 0.0, %v897
  %v899 = vpop.f32.mrb[0].mxu0
  %900 = vmatprep.mubr.bf16.mxu0 0
  %901 = vmatmul.mubr.bf16.gmra.mrb[0].mxu0 %v704
  %v902 = vpop.f32.mrb[0].mxu0
  %v903 = vadd.f32 0.0, %v902
  %v904 = vpop.f32.mrb[0].mxu0
  %v905 = vpop.f32.mrb[0].mxu0
  %v906 = vadd.f32 0.0, %v905
  %v907 = vpop.f32.mrb[0].mxu0
  %908 = vmatprep.mubr.bf16.mxu0 0
  %909 = vmatmul.mubr.bf16.gmra.mrb[0].mxu0 %v705
  %v910 = vpop.f32.mrb[0].mxu0
  %v911 = vadd.f32 0.0, %v910
  %v912 = vpop.f32.mrb[0].mxu0
  %v913 = vpop.f32.mrb[0].mxu0
  %v914 = vadd.f32 0.0, %v913
  %v915 = vpop.f32.mrb[0].mxu0
  %916 = vmatprep.mubr.bf16.mxu0 0
  %917 = vmatmul.mubr.bf16.gmra.mrb[0].mxu0 %v706
  %v918 = vpop.f32.mrb[0].mxu0
  %v919 = vadd.f32 0.0, %v918
  %v920 = vpop.f32.mrb[0].mxu0
  %v921 = vpop.f32.mrb[0].mxu0
  %v922 = vadd.f32 0.0, %v921
  %v923 = vpop.f32.mrb[0].mxu0
  %924 = vmatprep.mubr.bf16.mxu0 0
  %925 = vmatmul.mubr.bf16.gmra.mrb[0].mxu0 %v707
  %v926 = vpop.f32.mrb[0].mxu0
  %v927 = vadd.f32 0.0, %v926
  %v928 = vpop.f32.mrb[0].mxu0
  %v929 = vpop.f32.mrb[0].mxu0
  %v930 = vadd.f32 0.0, %v929
  %v931 = vpop.f32.mrb[0].mxu0
  %932 = vdwg.mxu0
  %v933 = vpack.c.bf16 %v810, %v807
  %v934 = vpack.c.bf16 %v818, %v815
  %v935 = vpack.c.bf16 %v826, %v823
  %v936 = vpack.c.bf16 %v834, %v831
  %v937 = vpack.c.bf16 %v842, %v839
  %v938 = vpack.c.bf16 %v850, %v847
  %v939 = vpack.c.bf16 %v858, %v855
  %v940 = vpack.c.bf16 %v866, %v863
  %v941 = vpack.c.bf16 %v874, %v871
  %v942 = vpack.c.bf16 %v882, %v879
  %v943 = vpack.c.bf16 %v890, %v887
  %v944 = vpack.c.bf16 %v898, %v895
  %v945 = vpack.c.bf16 %v906, %v903
  %v946 = vpack.c.bf16 %v914, %v911
  %v947 = vpack.c.bf16 %v922, %v919
  %v948 = vpack.c.bf16 %v930, %v927
  %v949 = vld [vmem:[%s6] sm:$0x1]
  %v951 = vpack.i.b16 %v949, %v949
  %v953 = vlaneseq
  %v954 = vshrl.u32 %v953, 7
  %v955 = vsub.s32 0, %v954
  %v956 = vrot.slane %v951, %v955
  %v957 = vadd.bf16 %v933, %v956
  %v958 = vadd.bf16 %v934, %v956
  %v959 = vadd.bf16 %v935, %v956
  %v960 = vadd.bf16 %v936, %v956
  %v961 = vadd.bf16 %v937, %v956
  %v962 = vadd.bf16 %v938, %v956
  %v963 = vadd.bf16 %v939, %v956
  %v964 = vadd.bf16 %v940, %v956
  %v965 = vadd.bf16 %v941, %v956
  %v966 = vadd.bf16 %v942, %v956
  %v967 = vadd.bf16 %v943, %v956
  %v968 = vadd.bf16 %v944, %v956
  %v969 = vadd.bf16 %v945, %v956
  %v970 = vadd.bf16 %v946, %v956
  %v971 = vadd.bf16 %v947, %v956
  %v972 = vadd.bf16 %v948, %v956
  %v973 = vmax.bf16 %v957, 0
  %v974 = vmax.bf16 %v958, 0
  %v975 = vmax.bf16 %v959, 0
  %v976 = vmax.bf16 %v960, 0
  %v977 = vmax.bf16 %v961, 0
  %v978 = vmax.bf16 %v962, 0
  %v979 = vmax.bf16 %v963, 0
  %v980 = vmax.bf16 %v964, 0
  %v981 = vmax.bf16 %v965, 0
  %v982 = vmax.bf16 %v966, 0
  %v983 = vmax.bf16 %v967, 0
  %v984 = vmax.bf16 %v968, 0
  %v985 = vmax.bf16 %v969, 0
  %v986 = vmax.bf16 %v970, 0
  %v987 = vmax.bf16 %v971, 0
  %v988 = vmax.bf16 %v972, 0
  %v989 = vld [vmem:[%s7] sm:$0xf]
  %v990 = vld [vmem:[%s7 + $0x4] sm:$0xf]
  %v991 = vld [vmem:[%s7 + $0x8] sm:$0xf]
  %v992 = vld [vmem:[%s7 + $0xc] sm:$0xf]
  %v993 = vld [vmem:[%s7 + $0x10] sm:$0xf]
  %v994 = vld [vmem:[%s7 + $0x14] sm:$0xf]
  %v995 = vld [vmem:[%s7 + $0x18] sm:$0xf]
  %v996 = vld [vmem:[%s7 + $0x1c] sm:$0xf]
  %v997 = vld [vmem:[%s8] sm:$0x1]
  %v999 = vlaneseq
  %v1000 = vshrl.u32 %v999, 7
  %v1001 = vsub.s32 0, %v1000
  %v1002 = vrot.slane %v997, %v1001
  %v1012 = vunpack.c.l.b16 %v989
  %v1013 = vunpack.c.l.b16 %v990
  %v1014 = vunpack.c.l.b16 %v991
  %v1015 = vunpack.c.l.b16 %v992
  %v1016 = vunpack.c.l.b16 %v993
  %v1017 = vunpack.c.l.b16 %v994
  %v1018 = vunpack.c.l.b16 %v995
  %v1019 = vunpack.c.l.b16 %v996
  %v1020 = vpack.c.b16 %v1013, %v1012
  %v1021 = vpack.c.b16 %v1015, %v1014
  %v1022 = vpack.c.b16 %v1017, %v1016
  %v1023 = vpack.c.b16 %v1019, %v1018
  %vm1028 = vcmask 523264
  %v1030 = vsel %vm1028, %v973, 0
  %v1033 = vsel %vm1028, %v974, 0
  %v1036 = vsel %vm1028, %v975, 0
  %v1039 = vsel %vm1028, %v976, 0
  %v1042 = vsel %vm1028, %v977, 0
  %v1045 = vsel %vm1028, %v978, 0
  %v1048 = vsel %vm1028, %v979, 0
  %v1051 = vsel %vm1028, %v980, 0
  %v1054 = vsel %vm1028, %v981, 0
  %v1057 = vsel %vm1028, %v982, 0
  %v1060 = vsel %vm1028, %v983, 0
  %v1063 = vsel %vm1028, %v984, 0
  %v1066 = vsel %vm1028, %v985, 0
  %v1069 = vsel %vm1028, %v986, 0
  %v1072 = vsel %vm1028, %v987, 0
  %v1075 = vsel %vm1028, %v988, 0
  %1077 = vmatprep.subr.bf16.mxu0 0
  %1078 = vmatpush1.bf16.msra.mxu0 %v1020
  %1079 = vmatprep.subr.bf16.mxu0 0
  %1080 = vmatpush1.bf16.msra.mxu0 %v1021
  %1081 = vmatprep.subr.bf16.mxu0 0
  %1082 = vmatpush1.bf16.msra.mxu0 %v1022
  %1083 = vmatprep.subr.bf16.mxu0 0
  %1084 = vmatpush1.bf16.msra.mxu0 %v1023
  %1085 = vmatprep.subr.bf16.mxu0 0
  %1086 = vmatpush1.bf16.msra.mxu0 0
  %1087 = vmatprep.subr.bf16.mxu0 0
  %1088 = vmatpush1.bf16.msra.mxu0 0
  %1089 = vmatprep.subr.bf16.mxu0 0
  %1090 = vmatpush1.bf16.msra.mxu0 0
  %1091 = vmatprep.subr.bf16.mxu0 0
  %1092 = vmatpush1.bf16.msra.mxu0 0
  %1093 = vmatprep.subr.bf16.mxu0 0
  %1094 = vmatpush1.bf16.msra.mxu0 0
  %1095 = vmatprep.subr.bf16.mxu0 0
  %1096 = vmatpush1.bf16.msra.mxu0 0
  %1097 = vmatprep.subr.bf16.mxu0 0
  %1098 = vmatpush1.bf16.msra.mxu0 0
  %1099 = vmatprep.subr.bf16.mxu0 0
  %1100 = vmatpush1.bf16.msra.mxu0 0
  %1101 = vmatprep.subr.bf16.mxu0 0
  %1102 = vmatpush1.bf16.msra.mxu0 0
  %1103 = vmatprep.subr.bf16.mxu0 0
  %1104 = vmatpush1.bf16.msra.mxu0 0
  %1105 = vmatprep.subr.bf16.mxu0 0
  %1106 = vmatpush1.bf16.msra.mxu0 0
  %1107 = vmatprep.subr.bf16.mxu0 0
  %1108 = vmatpush1.bf16.msra.mxu0 0
  %1109 = vmatprep.mubr.bf16.mxu0 0
  %1110 = vmatmul.mubr.bf16.gmra.mrb[0].mxu0 %v1030
  %v1111 = vpop.f32.mrb[0].mxu0
  %v1112 = vadd.f32 %v1002, %v1111
  %v1113 = vpop.f32.mrb[0].mxu0
  %v1114 = vpop.f32.mrb[0].mxu0
  %v1115 = vadd.f32 %v1002, %v1114
  %v1116 = vpop.f32.mrb[0].mxu0
  %1117 = vmatprep.mubr.bf16.mxu0 0
  %1118 = vmatmul.mubr.bf16.gmra.mrb[0].mxu0 %v1033
  %v1119 = vpop.f32.mrb[0].mxu0
  %v1120 = vadd.f32 %v1002, %v1119
  %v1121 = vpop.f32.mrb[0].mxu0
  %v1122 = vpop.f32.mrb[0].mxu0
  %v1123 = vadd.f32 %v1002, %v1122
  %v1124 = vpop.f32.mrb[0].mxu0
  %1125 = vmatprep.mubr.bf16.mxu0 0
  %1126 = vmatmul.mubr.bf16.gmra.mrb[0].mxu0 %v1036
  %v1127 = vpop.f32.mrb[0].mxu0
  %v1128 = vadd.f32 %v1002, %v1127
  %v1129 = vpop.f32.mrb[0].mxu0
  %v1130 = vpop.f32.mrb[0].mxu0
  %v1131 = vadd.f32 %v1002, %v1130
  %v1132 = vpop.f32.mrb[0].mxu0
  %1133 = vmatprep.mubr.bf16.mxu0 0
  %1134 = vmatmul.mubr.bf16.gmra.mrb[0].mxu0 %v1039
  %v1135 = vpop.f32.mrb[0].mxu0
  %v1136 = vadd.f32 %v1002, %v1135
  %v1137 = vpop.f32.mrb[0].mxu0
  %v1138 = vpop.f32.mrb[0].mxu0
  %v1139 = vadd.f32 %v1002, %v1138
  %v1140 = vpop.f32.mrb[0].mxu0
  %1141 = vmatprep.mubr.bf16.mxu0 0
  %1142 = vmatmul.mubr.bf16.gmra.mrb[0].mxu0 %v1042
  %v1143 = vpop.f32.mrb[0].mxu0
  %v1144 = vadd.f32 %v1002, %v1143
  %v1145 = vpop.f32.mrb[0].mxu0
  %v1146 = vpop.f32.mrb[0].mxu0
  %v1147 = vadd.f32 %v1002, %v1146
  %v1148 = vpop.f32.mrb[0].mxu0
  %1149 = vmatprep.mubr.bf16.mxu0 0
  %1150 = vmatmul.mubr.bf16.gmra.mrb[0].mxu0 %v1045
  %v1151 = vpop.f32.mrb[0].mxu0
  %v1152 = vadd.f32 %v1002, %v1151
  %v1153 = vpop.f32.mrb[0].mxu0
  %v1154 = vpop.f32.mrb[0].mxu0
  %v1155 = vadd.f32 %v1002, %v1154
  %v1156 = vpop.f32.mrb[0].mxu0
  %1157 = vmatprep.mubr.bf16.mxu0 0
  %1158 = vmatmul.mubr.bf16.gmra.mrb[0].mxu0 %v1048
  %v1159 = vpop.f32.mrb[0].mxu0
  %v1160 = vadd.f32 %v1002, %v1159
  %v1161 = vpop.f32.mrb[0].mxu0
  %v1162 = vpop.f32.mrb[0].mxu0
  %v1163 = vadd.f32 %v1002, %v1162
  %v1164 = vpop.f32.mrb[0].mxu0
  %1165 = vmatprep.mubr.bf16.mxu0 0
  %1166 = vmatmul.mubr.bf16.gmra.mrb[0].mxu0 %v1051
  %v1167 = vpop.f32.mrb[0].mxu0
  %v1168 = vadd.f32 %v1002, %v1167
  %v1169 = vpop.f32.mrb[0].mxu0
  %v1170 = vpop.f32.mrb[0].mxu0
  %v1171 = vadd.f32 %v1002, %v1170
  %v1172 = vpop.f32.mrb[0].mxu0
  %1173 = vmatprep.mubr.bf16.mxu0 0
  %1174 = vmatmul.mubr.bf16.gmra.mrb[0].mxu0 %v1054
  %v1175 = vpop.f32.mrb[0].mxu0
  %v1176 = vadd.f32 %v1002, %v1175
  %v1177 = vpop.f32.mrb[0].mxu0
  %v1178 = vpop.f32.mrb[0].mxu0
  %v1179 = vadd.f32 %v1002, %v1178
  %v1180 = vpop.f32.mrb[0].mxu0
  %1181 = vmatprep.mubr.bf16.mxu0 0
  %1182 = vmatmul.mubr.bf16.gmra.mrb[0].mxu0 %v1057
  %v1183 = vpop.f32.mrb[0].mxu0
  %v1184 = vadd.f32 %v1002, %v1183
  %v1185 = vpop.f32.mrb[0].mxu0
  %v1186 = vpop.f32.mrb[0].mxu0
  %v1187 = vadd.f32 %v1002, %v1186
  %v1188 = vpop.f32.mrb[0].mxu0
  %1189 = vmatprep.mubr.bf16.mxu0 0
  %1190 = vmatmul.mubr.bf16.gmra.mrb[0].mxu0 %v1060
  %v1191 = vpop.f32.mrb[0].mxu0
  %v1192 = vadd.f32 %v1002, %v1191
  %v1193 = vpop.f32.mrb[0].mxu0
  %v1194 = vpop.f32.mrb[0].mxu0
  %v1195 = vadd.f32 %v1002, %v1194
  %v1196 = vpop.f32.mrb[0].mxu0
  %1197 = vmatprep.mubr.bf16.mxu0 0
  %1198 = vmatmul.mubr.bf16.gmra.mrb[0].mxu0 %v1063
  %v1199 = vpop.f32.mrb[0].mxu0
  %v1200 = vadd.f32 %v1002, %v1199
  %v1201 = vpop.f32.mrb[0].mxu0
  %v1202 = vpop.f32.mrb[0].mxu0
  %v1203 = vadd.f32 %v1002, %v1202
  %v1204 = vpop.f32.mrb[0].mxu0
  %1205 = vmatprep.mubr.bf16.mxu0 0
  %1206 = vmatmul.mubr.bf16.gmra.mrb[0].mxu0 %v1066
  %v1207 = vpop.f32.mrb[0].mxu0
  %v1208 = vadd.f32 %v1002, %v1207
  %v1209 = vpop.f32.mrb[0].mxu0
  %v1210 = vpop.f32.mrb[0].mxu0
  %v1211 = vadd.f32 %v1002, %v1210
  %v1212 = vpop.f32.mrb[0].mxu0
  %1213 = vmatprep.mubr.bf16.mxu0 0
  %1214 = vmatmul.mubr.bf16.gmra.mrb[0].mxu0 %v1069
  %v1215 = vpop.f32.mrb[0].mxu0
  %v1216 = vadd.f32 %v1002, %v1215
  %v1217 = vpop.f32.mrb[0].mxu0
  %v1218 = vpop.f32.mrb[0].mxu0
  %v1219 = vadd.f32 %v1002, %v1218
  %v1220 = vpop.f32.mrb[0].mxu0
  %1221 = vmatprep.mubr.bf16.mxu0 0
  %1222 = vmatmul.mubr.bf16.gmra.mrb[0].mxu0 %v1072
  %v1223 = vpop.f32.mrb[0].mxu0
  %v1224 = vadd.f32 %v1002, %v1223
  %v1225 = vpop.f32.mrb[0].mxu0
  %v1226 = vpop.f32.mrb[0].mxu0
  %v1227 = vadd.f32 %v1002, %v1226
  %v1228 = vpop.f32.mrb[0].mxu0
  %1229 = vmatprep.mubr.bf16.mxu0 0
  %1230 = vmatmul.mubr.bf16.gmra.mrb[0].mxu0 %v1075
  %v1231 = vpop.f32.mrb[0].mxu0
  %v1232 = vadd.f32 %v1002, %v1231
  %v1233 = vpop.f32.mrb[0].mxu0
  %v1234 = vpop.f32.mrb[0].mxu0
  %v1235 = vadd.f32 %v1002, %v1234
  %v1236 = vpop.f32.mrb[0].mxu0
  %1237 = vdwg.mxu0
  %1238 = vmax.xlane.f32.xlu0 %v1112
  %v1239 = vpop.xlane.xlu0 %1238
  %1240 = vmax.xlane.f32.xlu0 %v1115
  %v1241 = vpop.xlane.xlu0 %1240
  %1242 = vmax.xlane.f32.xlu0 %v1120
  %v1243 = vpop.xlane.xlu0 %1242
  %1244 = vmax.xlane.f32.xlu0 %v1123
  %v1245 = vpop.xlane.xlu0 %1244
  %1246 = vmax.xlane.f32.xlu0 %v1128
  %v1247 = vpop.xlane.xlu0 %1246
  %1248 = vmax.xlane.f32.xlu0 %v1131
  %v1249 = vpop.xlane.xlu0 %1248
  %1250 = vmax.xlane.f32.xlu0 %v1136
  %v1251 = vpop.xlane.xlu0 %1250
  %1252 = vmax.xlane.f32.xlu0 %v1139
  %v1253 = vpop.xlane.xlu0 %1252
  %1254 = vmax.xlane.f32.xlu0 %v1144
  %v1255 = vpop.xlane.xlu0 %1254
  %1256 = vmax.xlane.f32.xlu0 %v1147
  %v1257 = vpop.xlane.xlu0 %1256
  %1258 = vmax.xlane.f32.xlu0 %v1152
  %v1259 = vpop.xlane.xlu0 %1258
  %1260 = vmax.xlane.f32.xlu0 %v1155
  %v1261 = vpop.xlane.xlu0 %1260
  %1262 = vmax.xlane.f32.xlu0 %v1160
  %v1263 = vpop.xlane.xlu0 %1262
  %1264 = vmax.xlane.f32.xlu0 %v1163
  %v1265 = vpop.xlane.xlu0 %1264
  %1266 = vmax.xlane.f32.xlu0 %v1168
  %v1267 = vpop.xlane.xlu0 %1266
  %1268 = vmax.xlane.f32.xlu0 %v1171
  %v1269 = vpop.xlane.xlu0 %1268
  %1270 = vmax.xlane.f32.xlu0 %v1176
  %v1271 = vpop.xlane.xlu0 %1270
  %1272 = vmax.xlane.f32.xlu0 %v1179
  %v1273 = vpop.xlane.xlu0 %1272
  %1274 = vmax.xlane.f32.xlu0 %v1184
  %v1275 = vpop.xlane.xlu0 %1274
  %1276 = vmax.xlane.f32.xlu0 %v1187
  %v1277 = vpop.xlane.xlu0 %1276
  %1278 = vmax.xlane.f32.xlu0 %v1192
  %v1279 = vpop.xlane.xlu0 %1278
  %1280 = vmax.xlane.f32.xlu0 %v1195
  %v1281 = vpop.xlane.xlu0 %1280
  %1282 = vmax.xlane.f32.xlu0 %v1200
  %v1283 = vpop.xlane.xlu0 %1282
  %1284 = vmax.xlane.f32.xlu0 %v1203
  %v1285 = vpop.xlane.xlu0 %1284
  %1286 = vmax.xlane.f32.xlu0 %v1208
  %v1287 = vpop.xlane.xlu0 %1286
  %1288 = vmax.xlane.f32.xlu0 %v1211
  %v1289 = vpop.xlane.xlu0 %1288
  %1290 = vmax.xlane.f32.xlu0 %v1216
  %v1291 = vpop.xlane.xlu0 %1290
  %1292 = vmax.xlane.f32.xlu0 %v1219
  %v1293 = vpop.xlane.xlu0 %1292
  %1294 = vmax.xlane.f32.xlu0 %v1224
  %v1295 = vpop.xlane.xlu0 %1294
  %1296 = vmax.xlane.f32.xlu0 %v1227
  %v1297 = vpop.xlane.xlu0 %1296
  %1298 = vmax.xlane.f32.xlu0 %v1232
  %v1299 = vpop.xlane.xlu0 %1298
  %1300 = vmax.xlane.f32.xlu0 %v1235
  %v1301 = vpop.xlane.xlu0 %1300
  %v1302 = vsub.f32 %v1112, %v1239
  %v1303 = vsub.f32 %v1115, %v1241
  %v1304 = vsub.f32 %v1120, %v1243
  %v1305 = vsub.f32 %v1123, %v1245
  %v1306 = vsub.f32 %v1128, %v1247
  %v1307 = vsub.f32 %v1131, %v1249
  %v1308 = vsub.f32 %v1136, %v1251
  %v1309 = vsub.f32 %v1139, %v1253
  %v1310 = vsub.f32 %v1144, %v1255
  %v1311 = vsub.f32 %v1147, %v1257
  %v1312 = vsub.f32 %v1152, %v1259
  %v1313 = vsub.f32 %v1155, %v1261
  %v1314 = vsub.f32 %v1160, %v1263
  %v1315 = vsub.f32 %v1163, %v1265
  %v1316 = vsub.f32 %v1168, %v1267
  %v1317 = vsub.f32 %v1171, %v1269
  %v1318 = vsub.f32 %v1176, %v1271
  %v1319 = vsub.f32 %v1179, %v1273
  %v1320 = vsub.f32 %v1184, %v1275
  %v1321 = vsub.f32 %v1187, %v1277
  %v1322 = vsub.f32 %v1192, %v1279
  %v1323 = vsub.f32 %v1195, %v1281
  %v1324 = vsub.f32 %v1200, %v1283
  %v1325 = vsub.f32 %v1203, %v1285
  %v1326 = vsub.f32 %v1208, %v1287
  %v1327 = vsub.f32 %v1211, %v1289
  %v1328 = vsub.f32 %v1216, %v1291
  %v1329 = vsub.f32 %v1219, %v1293
  %v1330 = vsub.f32 %v1224, %v1295
  %v1331 = vsub.f32 %v1227, %v1297
  %v1332 = vsub.f32 %v1232, %v1299
  %v1333 = vsub.f32 %v1235, %v1301
  %v1334 = vmul.f32 %v1302, 1.442695
  %v1335 = vpow.pop %v1334
  %v1336 = vmul.f32 %v1303, 1.442695
  %v1337 = vpow.pop %v1336
  %v1338 = vmul.f32 %v1304, 1.442695
  %v1339 = vpow.pop %v1338
  %v1340 = vmul.f32 %v1305, 1.442695
  %v1341 = vpow.pop %v1340
  %v1342 = vmul.f32 %v1306, 1.442695
  %v1343 = vpow.pop %v1342
  %v1344 = vmul.f32 %v1307, 1.442695
  %v1345 = vpow.pop %v1344
  %v1346 = vmul.f32 %v1308, 1.442695
  %v1347 = vpow.pop %v1346
  %v1348 = vmul.f32 %v1309, 1.442695
  %v1349 = vpow.pop %v1348
  %v1350 = vmul.f32 %v1310, 1.442695
  %v1351 = vpow.pop %v1350
  %v1352 = vmul.f32 %v1311, 1.442695
  %v1353 = vpow.pop %v1352
  %v1354 = vmul.f32 %v1312, 1.442695
  %v1355 = vpow.pop %v1354
  %v1356 = vmul.f32 %v1313, 1.442695
  %v1357 = vpow.pop %v1356
  %v1358 = vmul.f32 %v1314, 1.442695
  %v1359 = vpow.pop %v1358
  %v1360 = vmul.f32 %v1315, 1.442695
  %v1361 = vpow.pop %v1360
  %v1362 = vmul.f32 %v1316, 1.442695
  %v1363 = vpow.pop %v1362
  %v1364 = vmul.f32 %v1317, 1.442695
  %v1365 = vpow.pop %v1364
  %v1366 = vmul.f32 %v1318, 1.442695
  %v1367 = vpow.pop %v1366
  %v1368 = vmul.f32 %v1319, 1.442695
  %v1369 = vpow.pop %v1368
  %v1370 = vmul.f32 %v1320, 1.442695
  %v1371 = vpow.pop %v1370
  %v1372 = vmul.f32 %v1321, 1.442695
  %v1373 = vpow.pop %v1372
  %v1374 = vmul.f32 %v1322, 1.442695
  %v1375 = vpow.pop %v1374
  %v1376 = vmul.f32 %v1323, 1.442695
  %v1377 = vpow.pop %v1376
  %v1378 = vmul.f32 %v1324, 1.442695
  %v1379 = vpow.pop %v1378
  %v1380 = vmul.f32 %v1325, 1.442695
  %v1381 = vpow.pop %v1380
  %v1382 = vmul.f32 %v1326, 1.442695
  %v1383 = vpow.pop %v1382
  %v1384 = vmul.f32 %v1327, 1.442695
  %v1385 = vpow.pop %v1384
  %v1386 = vmul.f32 %v1328, 1.442695
  %v1387 = vpow.pop %v1386
  %v1388 = vmul.f32 %v1329, 1.442695
  %v1389 = vpow.pop %v1388
  %v1390 = vmul.f32 %v1330, 1.442695
  %v1391 = vpow.pop %v1390
  %v1392 = vmul.f32 %v1331, 1.442695
  %v1393 = vpow.pop %v1392
  %v1394 = vmul.f32 %v1332, 1.442695
  %v1395 = vpow.pop %v1394
  %v1396 = vmul.f32 %v1333, 1.442695
  %v1397 = vpow.pop %v1396
  %1398 = vadd.xlane.f32.xlu0 %v1335
  %v1399 = vpop.xlane.xlu0 %1398
  %1400 = vadd.xlane.f32.xlu0 %v1337
  %v1401 = vpop.xlane.xlu0 %1400
  %1402 = vadd.xlane.f32.xlu0 %v1339
  %v1403 = vpop.xlane.xlu0 %1402
  %1404 = vadd.xlane.f32.xlu0 %v1341
  %v1405 = vpop.xlane.xlu0 %1404
  %1406 = vadd.xlane.f32.xlu0 %v1343
  %v1407 = vpop.xlane.xlu0 %1406
  %1408 = vadd.xlane.f32.xlu0 %v1345
  %v1409 = vpop.xlane.xlu0 %1408
  %1410 = vadd.xlane.f32.xlu0 %v1347
  %v1411 = vpop.xlane.xlu0 %1410
  %1412 = vadd.xlane.f32.xlu0 %v1349
  %v1413 = vpop.xlane.xlu0 %1412
  %1414 = vadd.xlane.f32.xlu0 %v1351
  %v1415 = vpop.xlane.xlu0 %1414
  %1416 = vadd.xlane.f32.xlu0 %v1353
  %v1417 = vpop.xlane.xlu0 %1416
  %1418 = vadd.xlane.f32.xlu0 %v1355
  %v1419 = vpop.xlane.xlu0 %1418
  %1420 = vadd.xlane.f32.xlu0 %v1357
  %v1421 = vpop.xlane.xlu0 %1420
  %1422 = vadd.xlane.f32.xlu0 %v1359
  %v1423 = vpop.xlane.xlu0 %1422
  %1424 = vadd.xlane.f32.xlu0 %v1361
  %v1425 = vpop.xlane.xlu0 %1424
  %1426 = vadd.xlane.f32.xlu0 %v1363
  %v1427 = vpop.xlane.xlu0 %1426
  %1428 = vadd.xlane.f32.xlu0 %v1365
  %v1429 = vpop.xlane.xlu0 %1428
  %1430 = vadd.xlane.f32.xlu0 %v1367
  %v1431 = vpop.xlane.xlu0 %1430
  %1432 = vadd.xlane.f32.xlu0 %v1369
  %v1433 = vpop.xlane.xlu0 %1432
  %1434 = vadd.xlane.f32.xlu0 %v1371
  %v1435 = vpop.xlane.xlu0 %1434
  %1436 = vadd.xlane.f32.xlu0 %v1373
  %v1437 = vpop.xlane.xlu0 %1436
  %1438 = vadd.xlane.f32.xlu0 %v1375
  %v1439 = vpop.xlane.xlu0 %1438
  %1440 = vadd.xlane.f32.xlu0 %v1377
  %v1441 = vpop.xlane.xlu0 %1440
  %1442 = vadd.xlane.f32.xlu0 %v1379
  %v1443 = vpop.xlane.xlu0 %1442
  %1444 = vadd.xlane.f32.xlu0 %v1381
  %v1445 = vpop.xlane.xlu0 %1444
  %1446 = vadd.xlane.f32.xlu0 %v1383
  %v1447 = vpop.xlane.xlu0 %1446
  %1448 = vadd.xlane.f32.xlu0 %v1385
  %v1449 = vpop.xlane.xlu0 %1448
  %1450 = vadd.xlane.f32.xlu0 %v1387
  %v1451 = vpop.xlane.xlu0 %1450
  %1452 = vadd.xlane.f32.xlu0 %v1389
  %v1453 = vpop.xlane.xlu0 %1452
  %1454 = vadd.xlane.f32.xlu0 %v1391
  %v1455 = vpop.xlane.xlu0 %1454
  %1456 = vadd.xlane.f32.xlu0 %v1393
  %v1457 = vpop.xlane.xlu0 %1456
  %1458 = vadd.xlane.f32.xlu0 %v1395
  %v1459 = vpop.xlane.xlu0 %1458
  %1460 = vadd.xlane.f32.xlu0 %v1397
  %v1461 = vpop.xlane.xlu0 %1460
  %v1462 = vrcp.pop %v1399
  %v1463 = vrcp.pop %v1401
  %v1464 = vrcp.pop %v1403
  %v1465 = vrcp.pop %v1405
  %v1466 = vrcp.pop %v1407
  %v1467 = vrcp.pop %v1409
  %v1468 = vrcp.pop %v1411
  %v1469 = vrcp.pop %v1413
  %v1470 = vrcp.pop %v1415
  %v1471 = vrcp.pop %v1417
  %v1472 = vrcp.pop %v1419
  %v1473 = vrcp.pop %v1421
  %v1474 = vrcp.pop %v1423
  %v1475 = vrcp.pop %v1425
  %v1476 = vrcp.pop %v1427
  %v1477 = vrcp.pop %v1429
  %v1478 = vrcp.pop %v1431
  %v1479 = vrcp.pop %v1433
  %v1480 = vrcp.pop %v1435
  %v1481 = vrcp.pop %v1437
  %v1482 = vrcp.pop %v1439
  %v1483 = vrcp.pop %v1441
  %v1484 = vrcp.pop %v1443
  %v1485 = vrcp.pop %v1445
  %v1486 = vrcp.pop %v1447
  %v1487 = vrcp.pop %v1449
  %v1488 = vrcp.pop %v1451
  %v1489 = vrcp.pop %v1453
  %v1490 = vrcp.pop %v1455
  %v1491 = vrcp.pop %v1457
  %v1492 = vrcp.pop %v1459
  %v1493 = vrcp.pop %v1461
  %v1494 = vmul.f32 %v1335, %v1462
  %v1495 = vmul.f32 %v1337, %v1463
  %v1496 = vmul.f32 %v1339, %v1464
  %v1497 = vmul.f32 %v1341, %v1465
  %v1498 = vmul.f32 %v1343, %v1466
  %v1499 = vmul.f32 %v1345, %v1467
  %v1500 = vmul.f32 %v1347, %v1468
  %v1501 = vmul.f32 %v1349, %v1469
  %v1502 = vmul.f32 %v1351, %v1470
  %v1503 = vmul.f32 %v1353, %v1471
  %v1504 = vmul.f32 %v1355, %v1472
  %v1505 = vmul.f32 %v1357, %v1473
  %v1506 = vmul.f32 %v1359, %v1474
  %v1507 = vmul.f32 %v1361, %v1475
  %v1508 = vmul.f32 %v1363, %v1476
  %v1509 = vmul.f32 %v1365, %v1477
  %v1510 = vmul.f32 %v1367, %v1478
  %v1511 = vmul.f32 %v1369, %v1479
  %v1512 = vmul.f32 %v1371, %v1480
  %v1513 = vmul.f32 %v1373, %v1481
  %v1514 = vmul.f32 %v1375, %v1482
  %v1515 = vmul.f32 %v1377, %v1483
  %v1516 = vmul.f32 %v1379, %v1484
  %v1517 = vmul.f32 %v1381, %v1485
  %v1518 = vmul.f32 %v1383, %v1486
  %v1519 = vmul.f32 %v1385, %v1487
  %v1520 = vmul.f32 %v1387, %v1488
  %v1521 = vmul.f32 %v1389, %v1489
  %v1522 = vmul.f32 %v1391, %v1490
  %v1523 = vmul.f32 %v1393, %v1491
  %v1524 = vmul.f32 %v1395, %v1492
  %v1525 = vmul.f32 %v1397, %v1493
  %v1526 = vpack.c.bf16 %v1495, %v1494
  %v1527 = vpack.c.bf16 %v1497, %v1496
  %v1528 = vpack.c.bf16 %v1499, %v1498
  %v1529 = vpack.c.bf16 %v1501, %v1500
  %v1530 = vpack.c.bf16 %v1503, %v1502
  %v1531 = vpack.c.bf16 %v1505, %v1504
  %v1532 = vpack.c.bf16 %v1507, %v1506
  %v1533 = vpack.c.bf16 %v1509, %v1508
  %v1534 = vpack.c.bf16 %v1511, %v1510
  %v1535 = vpack.c.bf16 %v1513, %v1512
  %v1536 = vpack.c.bf16 %v1515, %v1514
  %v1537 = vpack.c.bf16 %v1517, %v1516
  %v1538 = vpack.c.bf16 %v1519, %v1518
  %v1539 = vpack.c.bf16 %v1521, %v1520
  %v1540 = vpack.c.bf16 %v1523, %v1522
  %v1541 = vpack.c.bf16 %v1525, %v1524
  %v1558 = vunpack.c.l.b16 %v1526
  %v1559 = vunpack.c.h.b16 %v1526
  %v1560 = vunpack.c.l.b16 %v1527
  %v1561 = vunpack.c.h.b16 %v1527
  %v1562 = vunpack.c.l.b16 %v1528
  %v1563 = vunpack.c.h.b16 %v1528
  %v1564 = vunpack.c.l.b16 %v1529
  %v1565 = vunpack.c.h.b16 %v1529
  %v1566 = vunpack.c.l.b16 %v1530
  %v1567 = vunpack.c.h.b16 %v1530
  %v1568 = vunpack.c.l.b16 %v1531
  %v1569 = vunpack.c.h.b16 %v1531
  %v1570 = vunpack.c.l.b16 %v1532
  %v1571 = vunpack.c.h.b16 %v1532
  %v1572 = vunpack.c.l.b16 %v1533
  %v1573 = vunpack.c.h.b16 %v1533
  %v1574 = vunpack.c.l.b16 %v1534
  %v1575 = vunpack.c.h.b16 %v1534
  %v1576 = vunpack.c.l.b16 %v1535
  %v1577 = vunpack.c.h.b16 %v1535
  %v1578 = vunpack.c.l.b16 %v1536
  %v1579 = vunpack.c.h.b16 %v1536
  %v1580 = vunpack.c.l.b16 %v1537
  %v1581 = vunpack.c.h.b16 %v1537
  %v1582 = vunpack.c.l.b16 %v1538
  %v1583 = vunpack.c.h.b16 %v1538
  %v1584 = vunpack.c.l.b16 %v1539
  %v1585 = vunpack.c.h.b16 %v1539
  %v1586 = vunpack.c.l.b16 %v1540
  %v1587 = vunpack.c.h.b16 %v1540
  %v1588 = vunpack.c.l.b16 %v1541
  %v1589 = vunpack.c.h.b16 %v1541
  %v1590 = vpack.c.b16 %v1558, %v1558
  %v1591 = vpack.c.b16 %v1559, %v1559
  %v1592 = vpack.c.b16 %v1560, %v1560
  %v1593 = vpack.c.b16 %v1561, %v1561
  %v1594 = vpack.c.b16 %v1562, %v1562
  %v1595 = vpack.c.b16 %v1563, %v1563
  %v1596 = vpack.c.b16 %v1564, %v1564
  %v1597 = vpack.c.b16 %v1565, %v1565
  %v1598 = vpack.c.b16 %v1566, %v1566
  %v1599 = vpack.c.b16 %v1567, %v1567
  %v1600 = vpack.c.b16 %v1568, %v1568
  %v1601 = vpack.c.b16 %v1569, %v1569
  %v1602 = vpack.c.b16 %v1570, %v1570
  %v1603 = vpack.c.b16 %v1571, %v1571
  %v1604 = vpack.c.b16 %v1572, %v1572
  %v1605 = vpack.c.b16 %v1573, %v1573
  %v1606 = vpack.c.b16 %v1574, %v1574
  %v1607 = vpack.c.b16 %v1575, %v1575
  %v1608 = vpack.c.b16 %v1576, %v1576
  %v1609 = vpack.c.b16 %v1577, %v1577
  %v1610 = vpack.c.b16 %v1578, %v1578
  %v1611 = vpack.c.b16 %v1579, %v1579
  %v1612 = vpack.c.b16 %v1580, %v1580
  %v1613 = vpack.c.b16 %v1581, %v1581
  %v1614 = vpack.c.b16 %v1582, %v1582
  %v1615 = vpack.c.b16 %v1583, %v1583
  %v1616 = vpack.c.b16 %v1584, %v1584
  %v1617 = vpack.c.b16 %v1585, %v1585
  %v1618 = vpack.c.b16 %v1586, %v1586
  %v1619 = vpack.c.b16 %v1587, %v1587
  %v1620 = vpack.c.b16 %v1588, %v1588
  %v1621 = vpack.c.b16 %v1589, %v1589
  %1654 = vst [vmem:[%s9] sm:$0xf] %v1590
  %1655 = vst [vmem:[%s9 + $0x4] sm:$0xf] %v1591
  %1656 = vst [vmem:[%s9 + $0x8] sm:$0xf] %v1592
  %1657 = vst [vmem:[%s9 + $0xc] sm:$0xf] %v1593
  %1658 = vst [vmem:[%s9 + $0x10] sm:$0xf] %v1594
  %1659 = vst [vmem:[%s9 + $0x14] sm:$0xf] %v1595
  %1660 = vst [vmem:[%s9 + $0x18] sm:$0xf] %v1596
  %1661 = vst [vmem:[%s9 + $0x1c] sm:$0xf] %v1597
  %1662 = vst [vmem:[%s9 + $0x20] sm:$0xf] %v1598
  %1663 = vst [vmem:[%s9 + $0x24] sm:$0xf] %v1599
  %1664 = vst [vmem:[%s9 + $0x28] sm:$0xf] %v1600
  %1665 = vst [vmem:[%s9 + $0x2c] sm:$0xf] %v1601
  %1666 = vst [vmem:[%s9 + $0x30] sm:$0xf] %v1602
  %1667 = vst [vmem:[%s9 + $0x34] sm:$0xf] %v1603
  %1668 = vst [vmem:[%s9 + $0x38] sm:$0xf] %v1604
  %1669 = vst [vmem:[%s9 + $0x3c] sm:$0xf] %v1605
  %1670 = vst [vmem:[%s9 + $0x40] sm:$0xf] %v1606
  %1671 = vst [vmem:[%s9 + $0x44] sm:$0xf] %v1607
  %1672 = vst [vmem:[%s9 + $0x48] sm:$0xf] %v1608
  %1673 = vst [vmem:[%s9 + $0x4c] sm:$0xf] %v1609
  %1674 = vst [vmem:[%s9 + $0x50] sm:$0xf] %v1610
  %1675 = vst [vmem:[%s9 + $0x54] sm:$0xf] %v1611
  %1676 = vst [vmem:[%s9 + $0x58] sm:$0xf] %v1612
  %1677 = vst [vmem:[%s9 + $0x5c] sm:$0xf] %v1613
  %1678 = vst [vmem:[%s9 + $0x60] sm:$0xf] %v1614
  %1679 = vst [vmem:[%s9 + $0x64] sm:$0xf] %v1615
  %1680 = vst [vmem:[%s9 + $0x68] sm:$0xf] %v1616
  %1681 = vst [vmem:[%s9 + $0x6c] sm:$0xf] %v1617
  %1682 = vst [vmem:[%s9 + $0x70] sm:$0xf] %v1618
  %1683 = vst [vmem:[%s9 + $0x74] sm:$0xf] %v1619
  %1684 = vst [vmem:[%s9 + $0x78] sm:$0xf] %v1620
  %1685 = vst [vmem:[%s9 + $0x7c] sm:$0xf] %v1621
  // Predicated region
  $region38: #{linear_nn_forward.1} parent=0 // pred_check
    _
  $region39: #{linear_nn_forward.1} parent=0 // pred_check_branch
    %1687 = sbr.rel (0) target = $region41
  $region40: #{linear_nn_forward.1} parent=0 // pred_region
    _
  $region41: #{linear_nn_forward.1} parent=0 // pred_fallthru
    _
  // Predicated region
  $region42: #{linear_nn_forward.1} parent=0 // pred_check
    _
  $region43: #{linear_nn_forward.1} parent=0 // pred_check_branch
    %1689 = sbr.rel (0) target = $region45
  $region44: #{linear_nn_forward.1} parent=0 // pred_region
    _
  $region45: #{linear_nn_forward.1} parent=0 // pred_fallthru
    _

</llo_original>
